<compile_context>
chip_gen: v6e
topology: v6e:2x2x1
jax: 0.10.0
libtpu: 0.0.40
codegen_flags: <defaults>
</compile_context>

<pallas_src>
import math
from functools import partial

import jax
import jax.numpy as jnp
from jax import lax
from jax.experimental import pallas as pl
from jax.experimental.pallas import tpu as pltpu


# ----------------------------------------------------------------------------
# Plain-JAX glue: MFCC front-end + interpolations
# ----------------------------------------------------------------------------
# TODO(synk): the MFCC class comes from torchaudio (not in the provided source);
# approximated deterministically (hann STFT -> power -> mel filterbank -> dB ->
# ortho DCT-II) in plain JAX.  FFT has no clean Pallas TPU equivalent.
def simple_mfcc(audio, *, sample_rate=44100, n_mfcc=30, n_fft=400, hop=200,
                n_mels=40):
    B, N = audio.shape
    pad = n_fft // 2
    x = jnp.pad(audio, ((0, 0), (pad, pad)), mode="reflect")
    n_frames = 1 + (x.shape[1] - n_fft) // hop
    idx = jnp.arange(n_frames)[:, None] * hop + jnp.arange(n_fft)[None, :]
    frames = x[:, idx]                                    # (B, F, n_fft)
    window = jnp.hanning(n_fft).astype(jnp.float32)
    spec = jnp.abs(jnp.fft.rfft(frames * window, axis=-1)) ** 2

    def hz_to_mel(f):
        return 2595.0 * jnp.log10(1.0 + f / 700.0)

    def mel_to_hz(m):
        return 700.0 * (10.0 ** (m / 2595.0) - 1.0)

    mel_pts = jnp.linspace(hz_to_mel(0.0), hz_to_mel(sample_rate / 2.0), n_mels + 2)
    hz_pts = mel_to_hz(mel_pts)
    fft_freqs = jnp.linspace(0.0, sample_rate / 2.0, n_fft // 2 + 1)
    lower, center, upper = hz_pts[:-2], hz_pts[1:-1], hz_pts[2:]
    f = fft_freqs[:, None]
    fb = jnp.maximum(
        0.0,
        jnp.minimum((f - lower[None, :]) / (center - lower)[None, :],
                    (upper[None, :] - f) / (upper - center)[None, :]))
    mel_spec = spec @ fb                                  # (B, F, n_mels)
    log_mel = 10.0 * jnp.log10(jnp.maximum(mel_spec, 1e-10))

    k = jnp.arange(n_mfcc)[:, None]
    n = jnp.arange(n_mels)[None, :]
    dct = jnp.cos(jnp.pi / n_mels * (n + 0.5) * k) * jnp.sqrt(2.0 / n_mels)
    dct = dct.at[0].multiply(1.0 / jnp.sqrt(2.0))
    mfcc = log_mel @ dct.T                                # (B, F, n_mfcc)
    return jnp.transpose(mfcc, (0, 2, 1))                 # (B, n_mfcc, F)


def interp_nearest(x, size):
    """F.interpolate(x, size=size, mode='nearest') for (B, C, L) inputs."""
    L = x.shape[-1]
    idx = jnp.floor(jnp.arange(size) * (L / size)).astype(jnp.int32)
    idx = jnp.clip(idx, 0, L - 1)
    return x[:, :, idx]


def interp_linear(x, scale_factor):
    """F.interpolate(x, scale_factor=sf, mode='linear', align_corners=False)."""
    L = x.shape[-1]
    out = int(math.floor(L * scale_factor))
    src = (jnp.arange(out) + 0.5) / scale_factor - 0.5
    src = jnp.clip(src, 0.0, L - 1)
    lo = jnp.floor(src).astype(jnp.int32)
    hi = jnp.clip(lo + 1, 0, L - 1)
    w = (src - lo.astype(jnp.float32))[None, None, :]
    return x[:, :, lo] * (1.0 - w) + x[:, :, hi] * w


# ----------------------------------------------------------------------------
# Shared in-kernel helpers
# ----------------------------------------------------------------------------
def _layernorm(x, w, b, eps=1e-5):
    mean = jnp.mean(x, axis=-1, keepdims=True)
    var = jnp.mean(jnp.square(x - mean), axis=-1, keepdims=True)
    return (x - mean) * lax.rsqrt(var + eps) * w + b


def _leaky_relu(x, slope=0.01):
    return jnp.where(x >= 0, x, slope * x)


def _bf16_dot(a, b):
    # bf16 MXU operands, f32 accumulation (review: v6e/v7x bf16-native MXU;
    # v5e still benefits while elementwise math stays f32).
    return jnp.dot(a.astype(jnp.bfloat16), b.astype(jnp.bfloat16),
                   preferred_element_type=jnp.float32)


def _pick_row_block(n_rows):
    """Row block: multiple of 8, divides n_rows, capped, preferring >=2 grid
    steps so the 'parallel' passes can shard across v7x's two TensorCores."""
    candidates = [rb for rb in (256, 128, 64, 32, 16, 8)
                  if rb <= n_rows and n_rows % rb == 0]
    if not candidates:
        return n_rows
    multi = [rb for rb in candidates if n_rows // rb >= 2]
    return multi[0] if multi else candidates[0]


# ----------------------------------------------------------------------------
# Kernel A: LayerNorm + input projection (fully parallel over T*B rows)
# ----------------------------------------------------------------------------
def proj_kernel(x_ref, ln_w_ref, ln_b_ref, w_ih_ref, b_ih_ref, gi_ref):
    x = _layernorm(x_ref[...], ln_w_ref[...], ln_b_ref[...])     # (rb, M) f32
    gi_ref[...] = _bf16_dot(x, w_ih_ref[...]) + b_ih_ref[...]    # (rb, 3H)


def _input_projection(x2d, p):
    R, M = x2d.shape
    H3 = p["w_ih"].shape[1]
    rb = _pick_row_block(R)
    return pl.pallas_call(
        proj_kernel,
        out_shape=jax.ShapeDtypeStruct((R, H3), jnp.float32),
        grid=(R // rb,),
        in_specs=[
            pl.BlockSpec((rb, M), lambda i: (i, 0)),
            pl.BlockSpec((1, M), lambda i: (0, 0)),
            pl.BlockSpec((1, M), lambda i: (0, 0)),
            pl.BlockSpec((M, H3), lambda i: (0, 0)),
            pl.BlockSpec((1, H3), lambda i: (0, 0)),
        ],
        out_specs=pl.BlockSpec((rb, H3), lambda i: (i, 0)),
        compiler_params=pltpu.CompilerParams(
            dimension_semantics=("parallel",)),
    )(x2d, p["ln0_w"], p["ln0_b"], p["w_ih"], p["b_ih"])


# ----------------------------------------------------------------------------
# Kernel B: GRU recurrence only (grid=(1,), in-kernel fori_loop over T)
# ----------------------------------------------------------------------------
def gru_kernel(gi_ref, w_hh_ref, b_hh_ref, h_ref):
    T, B, _ = gi_ref.shape
    H = w_hh_ref.shape[0]
    b_hh = b_hh_ref[...]                                          # (1, 3H)

    def step(t, h):
        gi = gi_ref[t]                                            # (B, 3H)
        gh = jnp.dot(h, w_hh_ref[...],
                     preferred_element_type=jnp.float32) + b_hh   # (B, 3H)
        # PyTorch gate ordering: r, z, n
        r = jax.nn.sigmoid(gi[:, 0:H] + gh[:, 0:H])
        zg = jax.nn.sigmoid(gi[:, H:2 * H] + gh[:, H:2 * H])
        n = jnp.tanh(gi[:, 2 * H:3 * H] + r * gh[:, 2 * H:3 * H])
        h_new = (1.0 - zg) * n + zg * h
        h_ref[t] = h_new
        return h_new

    lax.fori_loop(0, T, step, jnp.zeros((B, H), jnp.float32))


def _gru_recurrence(gi_tbc, p):
    T, B, H3 = gi_tbc.shape
    H = p["w_hh"].shape[0]
    return pl.pallas_call(
        gru_kernel,
        out_shape=jax.ShapeDtypeStruct((T, B, H), jnp.float32),
        grid=(1,),
        in_specs=[
            pl.BlockSpec((T, B, H3), lambda i: (0, 0, 0)),
            pl.BlockSpec((H, H3), lambda i: (0, 0)),
            pl.BlockSpec((1, H3), lambda i: (0, 0)),
        ],
        out_specs=pl.BlockSpec((T, B, H), lambda i: (0, 0, 0)),
        compiler_params=pltpu.CompilerParams(
            dimension_semantics=("arbitrary",)),     # sequential recurrence
    )(gi_tbc, p["w_hh"], p["b_hh"])


# ----------------------------------------------------------------------------
# Kernel C: bottleneck MLP + mu/logvar head (fully parallel over T*B rows)
# ----------------------------------------------------------------------------
def head_kernel(h_ref, w1_ref, w2_ref, w3_ref, vecs_ref, z_ref):
    d1 = w1_ref.shape[1]
    d2 = w2_ref.shape[1]
    d_out = w3_ref.shape[1]
    vecs = vecs_ref[...]                              # (8, 128) packed vectors
    b1, lnw1, lnb1 = vecs[0:1, :d1], vecs[1:2, :d1], vecs[2:3, :d1]
    b2, lnw2, lnb2 = vecs[3:4, :d2], vecs[4:5, :d2], vecs[5:6, :d2]
    b3 = vecs[6:7, :d_out]

    h = h_ref[...]                                                # (rb, H) f32
    h1 = _bf16_dot(h, w1_ref[...]) + b1
    h1 = _leaky_relu(_layernorm(h1, lnw1, lnb1))
    h2 = _bf16_dot(h1, w2_ref[...]) + b2
    h2 = _leaky_relu(_layernorm(h2, lnw2, lnb2))
    z_ref[...] = _bf16_dot(h2, w3_ref[...]) + b3                  # (rb, 2L)


def _pack_head_vecs(p):
    """Pack the 7 small bias/LN vectors of the bottleneck+head into (8, 128)."""
    rows = [p["b1"], p["lnw1"], p["lnb1"], p["b2"], p["lnw2"], p["lnb2"], p["b3"]]
    packed = jnp.zeros((8, 128), jnp.float32)
    for i, r in enumerate(rows):
        packed = packed.at[i, : r.shape[-1]].set(r[0])
    return packed


def _bottleneck_head(h2d, p):
    R, H = h2d.shape
    D1 = p["w1"].shape[1]
    D2 = p["w2"].shape[1]
    DO = p["w3"].shape[1]
    assert max(D1, D2, DO) <= 128, "packed-vector path assumes layer dims <= 128"
    vecs = _pack_head_vecs(p)
    rb = _pick_row_block(R)
    return pl.pallas_call(
        head_kernel,
        out_shape=jax.ShapeDtypeStruct((R, DO), jnp.float32),
        grid=(R // rb,),
        in_specs=[
            pl.BlockSpec((rb, H), lambda i: (i, 0)),
            pl.BlockSpec((H, D1), lambda i: (0, 0)),
            pl.BlockSpec((D1, D2), lambda i: (0, 0)),
            pl.BlockSpec((D2, DO), lambda i: (0, 0)),
            pl.BlockSpec((8, 128), lambda i: (0, 0)),
        ],
        out_specs=pl.BlockSpec((rb, DO), lambda i: (i, 0)),
        compiler_params=pltpu.CompilerParams(
            dimension_semantics=("parallel",)),
    )(h2d, p["w1"], p["w2"], p["w3"], vecs)


# ----------------------------------------------------------------------------
# Full forward pass (mirrors VariationalEncoder.forward, non-streaming branch)
# ----------------------------------------------------------------------------
def variational_encoder_forward(audio, params, *, resampling_factor=32,
                                latent_size=16):
    N = audio.shape[-1]
    mfcc = simple_mfcc(audio)                                 # (B, n_mfcc, F)
    mfcc = interp_nearest(mfcc, N)                            # (B, n_mfcc, N)
    x = interp_linear(mfcc, 1.0 / resampling_factor)          # (B, n_mfcc, T)
    x = jnp.transpose(x, (0, 2, 1))                           # (B, T, n_mfcc)
    B, T, M = x.shape
    H = params["w_hh"].shape[0]

    # Time-major, then flatten rows (t-major) so row r = (t, b), t = r // B.
    x_tbc = jnp.transpose(x, (1, 0, 2)).astype(jnp.float32)   # (T, B, M)
    x2d = x_tbc.reshape(T * B, M)

    gi2d = _input_projection(x2d, params)                     # (T*B, 3H)
    gi = gi2d.reshape(T, B, 3 * H)                            # XLA layout op
    h = _gru_recurrence(gi, params)                           # (T, B, H)
    z2d = _bottleneck_head(h.reshape(T * B, H), params)       # (T*B, 2L)

    z = z2d.reshape(T, B, 2 * latent_size)
    z = jnp.transpose(z, (1, 0, 2))                           # (B, T, 2L)
    mu, logvar = z[..., :latent_size], z[..., latent_size:]
    return mu, logvar


# ----------------------------------------------------------------------------
# Deterministic parameter init (shapes from VariationalEncoder.__init__)
# ----------------------------------------------------------------------------
def init_params(key, *, n_mfcc=30, layer_sizes=(128, 64, 32), latent_size=16):
    keys = jax.random.split(key, 10)

    def uni(k, shape, bound):
        return jax.random.uniform(k, shape, jnp.float32, -bound, bound)

    H = layer_sizes[0]
    kb = 1.0 / math.sqrt(H)
    k1 = 1.0 / math.sqrt(layer_sizes[0])
    k2 = 1.0 / math.sqrt(layer_sizes[1])
    k3 = 1.0 / math.sqrt(layer_sizes[2])

    p = {}
    # nn.LayerNorm(n_mfcc)
    p["ln0_w"] = jnp.ones((1, n_mfcc), jnp.float32)
    p["ln0_b"] = jnp.zeros((1, n_mfcc), jnp.float32)
    # nn.GRU(n_mfcc, 128) — weights stored pre-transposed: (in, 3H), (H, 3H).
    # (If loading real torch checkpoints, transpose weight_ih_l0 / weight_hh_l0.)
    p["w_ih"] = uni(keys[0], (n_mfcc, 3 * H), kb)
    p["w_hh"] = uni(keys[1], (H, 3 * H), kb)
    p["b_ih"] = uni(keys[2], (1, 3 * H), kb)
    p["b_hh"] = uni(keys[3], (1, 3 * H), kb)
    # bottleneck: Linear(128,64)+LN(64)+LeakyReLU, Linear(64,32)+LN(32)+LeakyReLU
    p["w1"] = uni(keys[4], (layer_sizes[0], layer_sizes[1]), k1)
    p["b1"] = uni(keys[5], (1, layer_sizes[1]), k1)
    p["lnw1"] = jnp.ones((1, layer_sizes[1]), jnp.float32)
    p["lnb1"] = jnp.zeros((1, layer_sizes[1]), jnp.float32)
    p["w2"] = uni(keys[6], (layer_sizes[1], layer_sizes[2]), k2)
    p["b2"] = uni(keys[7], (1, layer_sizes[2]), k2)
    p["lnw2"] = jnp.ones((1, layer_sizes[2]), jnp.float32)
    p["lnb2"] = jnp.zeros((1, layer_sizes[2]), jnp.float32)
    # mu_logvar_out: Linear(32, 2*latent)
    p["w3"] = uni(keys[8], (layer_sizes[2], 2 * latent_size), k3)
    p["b3"] = uni(keys[9], (1, 2 * latent_size), k3)
    return p


if __name__ == "__main__":
    key = jax.random.PRNGKey(0)
    k_audio, k_params = jax.random.split(key)

    # Small shapes: batch=2, n_samples=2048 -> T = 2048/32 = 64 GRU steps
    audio = jax.random.normal(k_audio, (2, 2048), dtype=jnp.float32)
    params = init_params(k_params)

    fwd = jax.jit(partial(variational_encoder_forward,
                          resampling_factor=32, latent_size=16))
    mu, logvar = fwd(audio, params)
    jax.block_until_ready((mu, logvar))

    assert mu.shape == (2, 64, 16) and logvar.shape == (2, 64, 16)
    assert bool(jnp.all(jnp.isfinite(mu))) and bool(jnp.all(jnp.isfinite(logvar)))
    print("KERNEL_OK")
</pallas_src>

<mosaic_0001>
module attributes {stable_mosaic.version = 11 : i64} {
  func.func @proj_kernel(%arg0: i32, %arg1: memref<64x30xf32, #tpu.memory_space<vmem>>, %arg2: memref<1x30xf32, #tpu.memory_space<vmem>>, %arg3: memref<1x30xf32, #tpu.memory_space<vmem>>, %arg4: memref<30x384xf32, #tpu.memory_space<vmem>>, %arg5: memref<1x384xf32, #tpu.memory_space<vmem>>, %arg6: memref<64x384xf32, #tpu.memory_space<vmem>>) attributes {dimension_semantics = [#tpu.dimension_semantics<parallel>], iteration_bounds = array<i64: 2>, scalar_prefetch = 0 : i64, scratch_operands = 0 : i64, tpu.core_type = #tpu.core_type<tc>, window_params = [{transform_indices = @transform_0, window_bounds = array<i64: 64, 30>}, {pipeline_mode = #tpu.pipeline_mode<synchronous>, transform_indices = @transform_1, window_bounds = array<i64: 1, 30>}, {pipeline_mode = #tpu.pipeline_mode<synchronous>, transform_indices = @transform_2, window_bounds = array<i64: 1, 30>}, {pipeline_mode = #tpu.pipeline_mode<synchronous>, transform_indices = @transform_3, window_bounds = array<i64: 30, 384>}, {pipeline_mode = #tpu.pipeline_mode<synchronous>, transform_indices = @transform_4, window_bounds = array<i64: 1, 384>}, {transform_indices = @transform_5, window_bounds = array<i64: 64, 384>}]} {
    %c0 = arith.constant 0 : index
    %c0_0 = arith.constant 0 : index
    %0 = vector.load %arg1[%c0, %c0_0] : memref<64x30xf32, #tpu.memory_space<vmem>>, vector<64x30xf32>
    %c0_1 = arith.constant 0 : index
    %c0_2 = arith.constant 0 : index
    %1 = vector.load %arg2[%c0_1, %c0_2] : memref<1x30xf32, #tpu.memory_space<vmem>>, vector<1x30xf32>
    %c0_3 = arith.constant 0 : index
    %c0_4 = arith.constant 0 : index
    %2 = vector.load %arg3[%c0_3, %c0_4] : memref<1x30xf32, #tpu.memory_space<vmem>>, vector<1x30xf32>
    %cst = arith.constant dense<0.000000e+00> : vector<64xf32>
    %3 = vector.multi_reduction <add>, %0, %cst [1] : vector<64x30xf32> to vector<64xf32>
    %4 = vector.shape_cast %3 : vector<64xf32> to vector<64x1xf32>
    %cst_5 = arith.constant 3.000000e+01 : f32
    %5 = vector.broadcast %cst_5 : f32 to vector<64x1xf32>
    %6 = arith.divf %4, %5 : vector<64x1xf32>
    %7 = vector.broadcast %6 : vector<64x1xf32> to vector<64x30xf32>
    %8 = arith.subf %0, %7 : vector<64x30xf32>
    %9 = arith.mulf %8, %8 : vector<64x30xf32>
    %cst_6 = arith.constant dense<0.000000e+00> : vector<64xf32>
    %10 = vector.multi_reduction <add>, %9, %cst_6 [1] : vector<64x30xf32> to vector<64xf32>
    %11 = vector.shape_cast %10 : vector<64xf32> to vector<64x1xf32>
    %cst_7 = arith.constant 3.000000e+01 : f32
    %12 = vector.broadcast %cst_7 : f32 to vector<64x1xf32>
    %13 = arith.divf %11, %12 : vector<64x1xf32>
    %14 = vector.broadcast %6 : vector<64x1xf32> to vector<64x30xf32>
    %15 = arith.subf %0, %14 : vector<64x30xf32>
    %cst_8 = arith.constant 9.99999974E-6 : f32
    %16 = vector.broadcast %cst_8 : f32 to vector<64x1xf32>
    %17 = arith.addf %13, %16 : vector<64x1xf32>
    %18 = math.rsqrt %17 : vector<64x1xf32>
    %19 = vector.broadcast %18 : vector<64x1xf32> to vector<64x30xf32>
    %20 = arith.mulf %15, %19 : vector<64x30xf32>
    %21 = vector.broadcast %1 : vector<1x30xf32> to vector<64x30xf32>
    %22 = arith.mulf %20, %21 : vector<64x30xf32>
    %23 = vector.broadcast %2 : vector<1x30xf32> to vector<64x30xf32>
    %24 = arith.addf %22, %23 : vector<64x30xf32>
    %c0_9 = arith.constant 0 : index
    %c0_10 = arith.constant 0 : index
    %25 = vector.load %arg4[%c0_9, %c0_10] : memref<30x384xf32, #tpu.memory_space<vmem>>, vector<30x384xf32>
    %26 = arith.truncf %24 : vector<64x30xf32> to vector<64x30xbf16>
    %27 = arith.truncf %25 : vector<30x384xf32> to vector<30x384xbf16>
    %cst_11 = arith.constant dense<0.000000e+00> : vector<64x384xf32>
    %28 = tpu.matmul %26, %27, %cst_11 {dimension_numbers = #tpu.dot_dimension_numbers<[1], [0], [0], [1], [0, 0, 1, 1], [], []>} : vector<64x30xbf16>, vector<30x384xbf16>, vector<64x384xf32> -> vector<64x384xf32>
    %c0_12 = arith.constant 0 : index
    %c0_13 = arith.constant 0 : index
    %29 = vector.load %arg5[%c0_12, %c0_13] : memref<1x384xf32, #tpu.memory_space<vmem>>, vector<1x384xf32>
    %30 = vector.broadcast %29 : vector<1x384xf32> to vector<64x384xf32>
    %31 = arith.addf %28, %30 : vector<64x384xf32>
    %c0_14 = arith.constant 0 : index
    %c0_15 = arith.constant 0 : index
    %32 = vector.load %arg6[%c0_14, %c0_15] : memref<64x384xf32, #tpu.memory_space<vmem>>, vector<64x384xf32>
    tpu.vector_store %arg6[%c0_14, %c0_15], %31 {strides = array<i32>} : memref<64x384xf32, #tpu.memory_space<vmem>>, vector<64x384xf32>,
    return
  }
  func.func @transform_0(%arg0: i32) -> (i32, i32) {
    %c0_i32 = arith.constant 0 : i32
    %c0_i32_0 = arith.constant 0 : i32
    return %arg0, %c0_i32 : i32, i32
  }
  func.func @transform_1(%arg0: i32) -> (i32, i32) {
    %c0_i32 = arith.constant 0 : i32
    %c0_i32_0 = arith.constant 0 : i32
    %c0_i32_1 = arith.constant 0 : i32
    return %c0_i32, %c0_i32_0 : i32, i32
  }
  func.func @transform_2(%arg0: i32) -> (i32, i32) {
    %c0_i32 = arith.constant 0 : i32
    %c0_i32_0 = arith.constant 0 : i32
    %c0_i32_1 = arith.constant 0 : i32
    return %c0_i32, %c0_i32_0 : i32, i32
  }
  func.func @transform_3(%arg0: i32) -> (i32, i32) {
    %c0_i32 = arith.constant 0 : i32
    %c0_i32_0 = arith.constant 0 : i32
    %c0_i32_1 = arith.constant 0 : i32
    return %c0_i32, %c0_i32_0 : i32, i32
  }
  func.func @transform_4(%arg0: i32) -> (i32, i32) {
    %c0_i32 = arith.constant 0 : i32
    %c0_i32_0 = arith.constant 0 : i32
    %c0_i32_1 = arith.constant 0 : i32
    return %c0_i32, %c0_i32_0 : i32, i32
  }
  func.func @transform_5(%arg0: i32) -> (i32, i32) {
    %c0_i32 = arith.constant 0 : i32
    %c0_i32_0 = arith.constant 0 : i32
    return %arg0, %c0_i32 : i32, i32
  }
}

module attributes {stable_mosaic.version = 11 : i64} {
  func.func @gru_kernel(%arg0: i32, %arg1: memref<64x2x384xf32, #tpu.memory_space<vmem>>, %arg2: memref<128x384xf32, #tpu.memory_space<vmem>>, %arg3: memref<1x384xf32, #tpu.memory_space<vmem>>, %arg4: memref<64x2x128xf32, #tpu.memory_space<vmem>>) attributes {dimension_semantics = [#tpu.dimension_semantics<arbitrary>], iteration_bounds = array<i64: 1>, scalar_prefetch = 0 : i64, scratch_operands = 0 : i64, tpu.core_type = #tpu.core_type<tc>, window_params = [{pipeline_mode = #tpu.pipeline_mode<synchronous>, transform_indices = @transform_0, window_bounds = array<i64: 64, 2, 384>}, {pipeline_mode = #tpu.pipeline_mode<synchronous>, transform_indices = @transform_1, window_bounds = array<i64: 128, 384>}, {pipeline_mode = #tpu.pipeline_mode<synchronous>, transform_indices = @transform_2, window_bounds = array<i64: 1, 384>}, {pipeline_mode = #tpu.pipeline_mode<synchronous>, transform_indices = @transform_3, window_bounds = array<i64: 64, 2, 128>}]} {
    %c0 = arith.constant 0 : index
    %c0_0 = arith.constant 0 : index
    %0 = vector.load %arg3[%c0, %c0_0] : memref<1x384xf32, #tpu.memory_space<vmem>>, vector<1x384xf32>
    %cst = arith.constant 0.000000e+00 : f32
    %1 = vector.broadcast %cst : f32 to vector<2x128xf32>
    %c0_i32 = arith.constant 0 : i32
    %c64_i32 = arith.constant 64 : i32
    %2 = arith.addi %c0_i32, %c64_i32 : i32
    %c1_i32 = arith.constant 1 : i32
    %3 = scf.for %arg5 = %c0_i32 to %2 step %c1_i32 iter_args(%arg6 = %1) -> (vector<2x128xf32>)  : i32 {
      %4 = arith.index_cast %arg5 : i32 to index
      %c0_2 = arith.constant 0 : index
      %c0_3 = arith.constant 0 : index
      %5 = vector.load %arg1[%4, %c0_2, %c0_3] : memref<64x2x384xf32, #tpu.memory_space<vmem>>, vector<1x2x384xf32>
      %6 = vector.shape_cast %5 : vector<1x2x384xf32> to vector<2x384xf32>
      %c0_4 = arith.constant 0 : index
      %c0_5 = arith.constant 0 : index
      %7 = vector.load %arg2[%c0_4, %c0_5] : memref<128x384xf32, #tpu.memory_space<vmem>>, vector<128x384xf32>
      %cst_6 = arith.constant dense<0.000000e+00> : vector<2x384xf32>
      %8 = tpu.matmul %arg6, %7, %cst_6 {dimension_numbers = #tpu.dot_dimension_numbers<[1], [0], [0], [1], [0, 0, 1, 1], [], []>} : vector<2x128xf32>, vector<128x384xf32>, vector<2x384xf32> -> vector<2x384xf32>
      %9 = vector.broadcast %0 : vector<1x384xf32> to vector<2x384xf32>
      %10 = arith.addf %8, %9 : vector<2x384xf32>
      %11 = vector.extract_strided_slice %6 {offsets = [0, 0], sizes = [2, 128], strides = [1, 1]} : vector<2x384xf32> to vector<2x128xf32>
      %12 = vector.extract_strided_slice %10 {offsets = [0, 0], sizes = [2, 128], strides = [1, 1]} : vector<2x384xf32> to vector<2x128xf32>
      %13 = arith.addf %11, %12 : vector<2x128xf32>
      %14 = arith.negf %13 : vector<2x128xf32>
      %15 = math.exp %14 : vector<2x128xf32>
      %cst_7 = arith.constant 1.000000e+00 : f32
      %16 = vector.broadcast %cst_7 : f32 to vector<2x128xf32>
      %17 = arith.addf %16, %15 : vector<2x128xf32>
      %18 = arith.divf %16, %17 : vector<2x128xf32>
      %19 = vector.extract_strided_slice %6 {offsets = [0, 128], sizes = [2, 128], strides = [1, 1]} : vector<2x384xf32> to vector<2x128xf32>
      %20 = vector.extract_strided_slice %10 {offsets = [0, 128], sizes = [2, 128], strides = [1, 1]} : vector<2x384xf32> to vector<2x128xf32>
      %21 = arith.addf %19, %20 : vector<2x128xf32>
      %22 = arith.negf %21 : vector<2x128xf32>
      %23 = math.exp %22 : vector<2x128xf32>
      %cst_8 = arith.constant 1.000000e+00 : f32
      %24 = vector.broadcast %cst_8 : f32 to vector<2x128xf32>
      %25 = arith.addf %24, %23 : vector<2x128xf32>
      %26 = arith.divf %24, %25 : vector<2x128xf32>
      %27 = vector.extract_strided_slice %6 {offsets = [0, 256], sizes = [2, 128], strides = [1, 1]} : vector<2x384xf32> to vector<2x128xf32>
      %28 = vector.extract_strided_slice %10 {offsets = [0, 256], sizes = [2, 128], strides = [1, 1]} : vector<2x384xf32> to vector<2x128xf32>
      %29 = arith.mulf %18, %28 : vector<2x128xf32>
      %30 = arith.addf %27, %29 : vector<2x128xf32>
      %31 = math.tanh %30 : vector<2x128xf32>
      %cst_9 = arith.constant 1.000000e+00 : f32
      %32 = vector.broadcast %cst_9 : f32 to vector<2x128xf32>
      %33 = arith.subf %32, %26 : vector<2x128xf32>
      %34 = arith.mulf %33, %31 : vector<2x128xf32>
      %35 = arith.mulf %26, %arg6 : vector<2x128xf32>
      %36 = arith.addf %34, %35 : vector<2x128xf32>
      %37 = arith.index_cast %arg5 : i32 to index
      %c0_10 = arith.constant 0 : index
      %c0_11 = arith.constant 0 : index
      %38 = vector.load %arg4[%37, %c0_10, %c0_11] : memref<64x2x128xf32, #tpu.memory_space<vmem>>, vector<1x2x128xf32>
      %39 = vector.shape_cast %38 : vector<1x2x128xf32> to vector<2x128xf32>
      %40 = vector.shape_cast %36 : vector<2x128xf32> to vector<1x2x128xf32>
      tpu.vector_store %arg4[%37, %c0_10, %c0_11], %40 {strides = array<i32>} : memref<64x2x128xf32, #tpu.memory_space<vmem>>, vector<1x2x128xf32>,
      scf.yield %36 : vector<2x128xf32>
    }
    %c64_i32_1 = arith.constant 64 : i32
    return
  }
  func.func @transform_0(%arg0: i32) -> (i32, i32, i32) {
    %c0_i32 = arith.constant 0 : i32
    %c0_i32_0 = arith.constant 0 : i32
    %c0_i32_1 = arith.constant 0 : i32
    %c0_i32_2 = arith.constant 0 : i32
    return %c0_i32, %c0_i32_0, %c0_i32_1 : i32, i32, i32
  }
  func.func @transform_1(%arg0: i32) -> (i32, i32) {
    %c0_i32 = arith.constant 0 : i32
    %c0_i32_0 = arith.constant 0 : i32
    %c0_i32_1 = arith.constant 0 : i32
    return %c0_i32, %c0_i32_0 : i32, i32
  }
  func.func @transform_2(%arg0: i32) -> (i32, i32) {
    %c0_i32 = arith.constant 0 : i32
    %c0_i32_0 = arith.constant 0 : i32
    %c0_i32_1 = arith.constant 0 : i32
    return %c0_i32, %c0_i32_0 : i32, i32
  }
  func.func @transform_3(%arg0: i32) -> (i32, i32, i32) {
    %c0_i32 = arith.constant 0 : i32
    %c0_i32_0 = arith.constant 0 : i32
    %c0_i32_1 = arith.constant 0 : i32
    %c0_i32_2 = arith.constant 0 : i32
    return %c0_i32, %c0_i32_0, %c0_i32_1 : i32, i32, i32
  }
}

module attributes {stable_mosaic.version = 11 : i64} {
  func.func @head_kernel(%arg0: i32, %arg1: memref<64x128xf32, #tpu.memory_space<vmem>>, %arg2: memref<128x64xf32, #tpu.memory_space<vmem>>, %arg3: memref<64x32xf32, #tpu.memory_space<vmem>>, %arg4: memref<32x32xf32, #tpu.memory_space<vmem>>, %arg5: memref<8x128xf32, #tpu.memory_space<vmem>>, %arg6: memref<64x32xf32, #tpu.memory_space<vmem>>) attributes {dimension_semantics = [#tpu.dimension_semantics<parallel>], iteration_bounds = array<i64: 2>, scalar_prefetch = 0 : i64, scratch_operands = 0 : i64, tpu.core_type = #tpu.core_type<tc>, window_params = [{transform_indices = @transform_0, window_bounds = array<i64: 64, 128>}, {pipeline_mode = #tpu.pipeline_mode<synchronous>, transform_indices = @transform_1, window_bounds = array<i64: 128, 64>}, {pipeline_mode = #tpu.pipeline_mode<synchronous>, transform_indices = @transform_2, window_bounds = array<i64: 64, 32>}, {pipeline_mode = #tpu.pipeline_mode<synchronous>, transform_indices = @transform_3, window_bounds = array<i64: 32, 32>}, {pipeline_mode = #tpu.pipeline_mode<synchronous>, transform_indices = @transform_4, window_bounds = array<i64: 8, 128>}, {transform_indices = @transform_5, window_bounds = array<i64: 64, 32>}]} {
    %c0 = arith.constant 0 : index
    %c0_0 = arith.constant 0 : index
    %0 = vector.load %arg5[%c0, %c0_0] : memref<8x128xf32, #tpu.memory_space<vmem>>, vector<8x128xf32>
    %1 = vector.extract_strided_slice %0 {offsets = [0, 0], sizes = [1, 64], strides = [1, 1]} : vector<8x128xf32> to vector<1x64xf32>
    %2 = vector.extract_strided_slice %0 {offsets = [1, 0], sizes = [1, 64], strides = [1, 1]} : vector<8x128xf32> to vector<1x64xf32>
    %3 = vector.extract_strided_slice %0 {offsets = [2, 0], sizes = [1, 64], strides = [1, 1]} : vector<8x128xf32> to vector<1x64xf32>
    %4 = vector.extract_strided_slice %0 {offsets = [3, 0], sizes = [1, 32], strides = [1, 1]} : vector<8x128xf32> to vector<1x32xf32>
    %5 = vector.extract_strided_slice %0 {offsets = [4, 0], sizes = [1, 32], strides = [1, 1]} : vector<8x128xf32> to vector<1x32xf32>
    %6 = vector.extract_strided_slice %0 {offsets = [5, 0], sizes = [1, 32], strides = [1, 1]} : vector<8x128xf32> to vector<1x32xf32>
    %7 = vector.extract_strided_slice %0 {offsets = [6, 0], sizes = [1, 32], strides = [1, 1]} : vector<8x128xf32> to vector<1x32xf32>
    %c0_1 = arith.constant 0 : index
    %c0_2 = arith.constant 0 : index
    %8 = vector.load %arg1[%c0_1, %c0_2] : memref<64x128xf32, #tpu.memory_space<vmem>>, vector<64x128xf32>
    %c0_3 = arith.constant 0 : index
    %c0_4 = arith.constant 0 : index
    %9 = vector.load %arg2[%c0_3, %c0_4] : memref<128x64xf32, #tpu.memory_space<vmem>>, vector<128x64xf32>
    %10 = arith.truncf %8 : vector<64x128xf32> to vector<64x128xbf16>
    %11 = arith.truncf %9 : vector<128x64xf32> to vector<128x64xbf16>
    %cst = arith.constant dense<0.000000e+00> : vector<64x64xf32>
    %12 = tpu.matmul %10, %11, %cst {dimension_numbers = #tpu.dot_dimension_numbers<[1], [0], [0], [1], [0, 0, 1, 1], [], []>} : vector<64x128xbf16>, vector<128x64xbf16>, vector<64x64xf32> -> vector<64x64xf32>
    %13 = vector.broadcast %1 : vector<1x64xf32> to vector<64x64xf32>
    %14 = arith.addf %12, %13 : vector<64x64xf32>
    %cst_5 = arith.constant dense<0.000000e+00> : vector<64xf32>
    %15 = vector.multi_reduction <add>, %14, %cst_5 [1] : vector<64x64xf32> to vector<64xf32>
    %16 = vector.shape_cast %15 : vector<64xf32> to vector<64x1xf32>
    %cst_6 = arith.constant 6.400000e+01 : f32
    %17 = vector.broadcast %cst_6 : f32 to vector<64x1xf32>
    %18 = arith.divf %16, %17 : vector<64x1xf32>
    %19 = vector.broadcast %18 : vector<64x1xf32> to vector<64x64xf32>
    %20 = arith.subf %14, %19 : vector<64x64xf32>
    %21 = arith.mulf %20, %20 : vector<64x64xf32>
    %cst_7 = arith.constant dense<0.000000e+00> : vector<64xf32>
    %22 = vector.multi_reduction <add>, %21, %cst_7 [1] : vector<64x64xf32> to vector<64xf32>
    %23 = vector.shape_cast %22 : vector<64xf32> to vector<64x1xf32>
    %cst_8 = arith.constant 6.400000e+01 : f32
    %24 = vector.broadcast %cst_8 : f32 to vector<64x1xf32>
    %25 = arith.divf %23, %24 : vector<64x1xf32>
    %26 = vector.broadcast %18 : vector<64x1xf32> to vector<64x64xf32>
    %27 = arith.subf %14, %26 : vector<64x64xf32>
    %cst_9 = arith.constant 9.99999974E-6 : f32
    %28 = vector.broadcast %cst_9 : f32 to vector<64x1xf32>
    %29 = arith.addf %25, %28 : vector<64x1xf32>
    %30 = math.rsqrt %29 : vector<64x1xf32>
    %31 = vector.broadcast %30 : vector<64x1xf32> to vector<64x64xf32>
    %32 = arith.mulf %27, %31 : vector<64x64xf32>
    %33 = vector.broadcast %2 : vector<1x64xf32> to vector<64x64xf32>
    %34 = arith.mulf %32, %33 : vector<64x64xf32>
    %35 = vector.broadcast %3 : vector<1x64xf32> to vector<64x64xf32>
    %36 = arith.addf %34, %35 : vector<64x64xf32>
    %cst_10 = arith.constant 0.000000e+00 : f32
    %37 = vector.broadcast %cst_10 : f32 to vector<64x64xf32>
    %38 = arith.cmpf oge, %36, %37 : vector<64x64xf32>
    %cst_11 = arith.constant 0.00999999977 : f32
    %39 = vector.broadcast %cst_11 : f32 to vector<64x64xf32>
    %40 = arith.mulf %39, %36 : vector<64x64xf32>
    %41 = arith.select %38, %36, %40 : vector<64x64xi1>, vector<64x64xf32>
    %c0_12 = arith.constant 0 : index
    %c0_13 = arith.constant 0 : index
    %42 = vector.load %arg3[%c0_12, %c0_13] : memref<64x32xf32, #tpu.memory_space<vmem>>, vector<64x32xf32>
    %43 = arith.truncf %41 : vector<64x64xf32> to vector<64x64xbf16>
    %44 = arith.truncf %42 : vector<64x32xf32> to vector<64x32xbf16>
    %cst_14 = arith.constant dense<0.000000e+00> : vector<64x32xf32>
    %45 = tpu.matmul %43, %44, %cst_14 {dimension_numbers = #tpu.dot_dimension_numbers<[1], [0], [0], [1], [0, 0, 1, 1], [], []>} : vector<64x64xbf16>, vector<64x32xbf16>, vector<64x32xf32> -> vector<64x32xf32>
    %46 = vector.broadcast %4 : vector<1x32xf32> to vector<64x32xf32>
    %47 = arith.addf %45, %46 : vector<64x32xf32>
    %cst_15 = arith.constant dense<0.000000e+00> : vector<64xf32>
    %48 = vector.multi_reduction <add>, %47, %cst_15 [1] : vector<64x32xf32> to vector<64xf32>
    %49 = vector.shape_cast %48 : vector<64xf32> to vector<64x1xf32>
    %cst_16 = arith.constant 3.200000e+01 : f32
    %50 = vector.broadcast %cst_16 : f32 to vector<64x1xf32>
    %51 = arith.divf %49, %50 : vector<64x1xf32>
    %52 = vector.broadcast %51 : vector<64x1xf32> to vector<64x32xf32>
    %53 = arith.subf %47, %52 : vector<64x32xf32>
    %54 = arith.mulf %53, %53 : vector<64x32xf32>
    %cst_17 = arith.constant dense<0.000000e+00> : vector<64xf32>
    %55 = vector.multi_reduction <add>, %54, %cst_17 [1] : vector<64x32xf32> to vector<64xf32>
    %56 = vector.shape_cast %55 : vector<64xf32> to vector<64x1xf32>
    %cst_18 = arith.constant 3.200000e+01 : f32
    %57 = vector.broadcast %cst_18 : f32 to vector<64x1xf32>
    %58 = arith.divf %56, %57 : vector<64x1xf32>
    %59 = vector.broadcast %51 : vector<64x1xf32> to vector<64x32xf32>
    %60 = arith.subf %47, %59 : vector<64x32xf32>
    %cst_19 = arith.constant 9.99999974E-6 : f32
    %61 = vector.broadcast %cst_19 : f32 to vector<64x1xf32>
    %62 = arith.addf %58, %61 : vector<64x1xf32>
    %63 = math.rsqrt %62 : vector<64x1xf32>
    %64 = vector.broadcast %63 : vector<64x1xf32> to vector<64x32xf32>
    %65 = arith.mulf %60, %64 : vector<64x32xf32>
    %66 = vector.broadcast %5 : vector<1x32xf32> to vector<64x32xf32>
    %67 = arith.mulf %65, %66 : vector<64x32xf32>
    %68 = vector.broadcast %6 : vector<1x32xf32> to vector<64x32xf32>
    %69 = arith.addf %67, %68 : vector<64x32xf32>
    %cst_20 = arith.constant 0.000000e+00 : f32
    %70 = vector.broadcast %cst_20 : f32 to vector<64x32xf32>
    %71 = arith.cmpf oge, %69, %70 : vector<64x32xf32>
    %cst_21 = arith.constant 0.00999999977 : f32
    %72 = vector.broadcast %cst_21 : f32 to vector<64x32xf32>
    %73 = arith.mulf %72, %69 : vector<64x32xf32>
    %74 = arith.select %71, %69, %73 : vector<64x32xi1>, vector<64x32xf32>
    %c0_22 = arith.constant 0 : index
    %c0_23 = arith.constant 0 : index
    %75 = vector.load %arg4[%c0_22, %c0_23] : memref<32x32xf32, #tpu.memory_space<vmem>>, vector<32x32xf32>
    %76 = arith.truncf %74 : vector<64x32xf32> to vector<64x32xbf16>
    %77 = arith.truncf %75 : vector<32x32xf32> to vector<32x32xbf16>
    %cst_24 = arith.constant dense<0.000000e+00> : vector<64x32xf32>
    %78 = tpu.matmul %76, %77, %cst_24 {dimension_numbers = #tpu.dot_dimension_numbers<[1], [0], [0], [1], [0, 0, 1, 1], [], []>} : vector<64x32xbf16>, vector<32x32xbf16>, vector<64x32xf32> -> vector<64x32xf32>
    %79 = vector.broadcast %7 : vector<1x32xf32> to vector<64x32xf32>
    %80 = arith.addf %78, %79 : vector<64x32xf32>
    %c0_25 = arith.constant 0 : index
    %c0_26 = arith.constant 0 : index
    %81 = vector.load %arg6[%c0_25, %c0_26] : memref<64x32xf32, #tpu.memory_space<vmem>>, vector<64x32xf32>
    tpu.vector_store %arg6[%c0_25, %c0_26], %80 {strides = array<i32>} : memref<64x32xf32, #tpu.memory_space<vmem>>, vector<64x32xf32>,
    return
  }
  func.func @transform_0(%arg0: i32) -> (i32, i32) {
    %c0_i32 = arith.constant 0 : i32
    %c0_i32_0 = arith.constant 0 : i32
    return %arg0, %c0_i32 : i32, i32
  }
  func.func @transform_1(%arg0: i32) -> (i32, i32) {
    %c0_i32 = arith.constant 0 : i32
    %c0_i32_0 = arith.constant 0 : i32
    %c0_i32_1 = arith.constant 0 : i32
    return %c0_i32, %c0_i32_0 : i32, i32
  }
  func.func @transform_2(%arg0: i32) -> (i32, i32) {
    %c0_i32 = arith.constant 0 : i32
    %c0_i32_0 = arith.constant 0 : i32
    %c0_i32_1 = arith.constant 0 : i32
    return %c0_i32, %c0_i32_0 : i32, i32
  }
  func.func @transform_3(%arg0: i32) -> (i32, i32) {
    %c0_i32 = arith.constant 0 : i32
    %c0_i32_0 = arith.constant 0 : i32
    %c0_i32_1 = arith.constant 0 : i32
    return %c0_i32, %c0_i32_0 : i32, i32
  }
  func.func @transform_4(%arg0: i32) -> (i32, i32) {
    %c0_i32 = arith.constant 0 : i32
    %c0_i32_0 = arith.constant 0 : i32
    %c0_i32_1 = arith.constant 0 : i32
    return %c0_i32, %c0_i32_0 : i32, i32
  }
  func.func @transform_5(%arg0: i32) -> (i32, i32) {
    %c0_i32 = arith.constant 0 : i32
    %c0_i32_0 = arith.constant 0 : i32
    return %arg0, %c0_i32 : i32, i32
  }
}

</mosaic_0001>

<llo_original>
// kernel: reverse
$region0: #{reverse}
  %s0 = inlined_call_operand.vmem [shape: f32[2,256], index: 0, kind: input, shape index: {}]
  %s1 = inlined_call_operand.vmem [shape: f32[2,256], index: 1, kind: output, shape index: {}]
  %v2 = vlaneseq
  %v3 = vsub.s32 127, %v2
  %4 = vset.pattern.permute.xlu0 %v3
  $region1: #{reverse} parent=0
    #allocation0 [shape = 'u8[4096]{0}', space=vmem, size = 0x1000, scoped, tag = 'operand span for operand 0']
    #allocation1 [shape = 'u8[2048]{0}', space=vmem, size = 0x800, scoped, tag = 'packed  for operand 0']
    #allocation2 [shape = 'u8[4096]{0}', space=vmem, size = 0x1000, scoped, tag = 'operand span for operand 1']
    #allocation3 [shape = 'u8[2048]{0}', space=vmem, size = 0x800, scoped, tag = 'packed  for operand 1']
    loop: start=0, step=1, limit=4
    $region2: #{reverse} parent=1 // loop_pre_header
      _
    $region3: #{reverse} parent=1 // loop_header
      %s6 = sphi 0, %s10
      %p7 = scmp.ge.s32.totalorder %s6, 4
      %s13 = sphi 0, %s25
      %s14 = sphi 0, %s21
      %s15 = sphi 0, %s13
      %s16 = sphi 0, %s14
      %s17 = sphi 0, %s15
      %s18 = sphi 0, %s16
    $region4: #{reverse} parent=1 // loop_header_branch
      %9 = sbr.rel (%p7) target = $region8
    $region5: #{reverse} parent=1 // loop_body
      %s11 = ssub.s32 %s6, 1
      %s12 = ssub.s32 %s6, 2
      %s19 = sadd.s32 1, %s14
      %p20 = scmp.ge.s32.totalorder %s19, 2
      %s21 = scalar_select %p20, 0, %s19
      %s22 = sadd.s32 1, %s13
      %s23 = scalar_select %p20, %s22, %s13
      %p24 = scmp.ge.s32.totalorder %s23, 1
      %s25 = scalar_select %p24, 0, %s23
      %p26 = scmp.le.s32.totalorder 1, %s6
      %p27 = scmp.lt.s32.totalorder %s6, 3
      %p28 = pnand %p26, %p27
      %p29 = pneg %p28
      // Predicated region
      $region9: #{reverse} parent=5 // pred_check
        _
      $region10: #{reverse} parent=5 // pred_check_branch
        %31 = sbr.rel (%p28) target = $region12
      $region11: #{reverse} parent=5 // pred_region
        %s32 = ssub.s32 %s6, 1
      $region12: #{reverse} parent=5 // pred_fallthru
        _
      %p33 = scmp.lt.s32.totalorder %s6, 2
      // Predicated region
      $region13: #{reverse} parent=5 // pred_check
        %p34 = pneg %p33
      $region14: #{reverse} parent=5 // pred_check_branch
        %36 = sbr.rel (%p34) target = $region16
      $region15: #{reverse} parent=5 // pred_region
        %s37 = sand.u32 %s6, 1
        %s38 = sand.u32 %s6, 1
        %s39 = smul.addr %s38, 2
        %s40 = scalar_lea.vmem [#allocation1], %s39
        %s41 = ssub.s32 1, %s14
        %s42 = smul.addr %s13, 2
        %s43 = sadd.s32 %s41, %s42
        %s44 = smul.addr %s43, 2
        %s45 = scalar_lea.vmem %s0, %s44
        // Predicated region
        $region17: #{reverse} parent=15 // pred_check
          _
        $region18: #{reverse} parent=15 // pred_check_branch
          %47 = sbr.rel (0) target = $region20
        $region19: #{reverse} parent=15 // pred_region
          // Predicated region
          $region21: #{reverse} parent=19 // pred_check
            _
          $region22: #{reverse} parent=19 // pred_check_branch
            %49 = sbr.rel target = $region24
          $region23: #{reverse} parent=19 // pred_region
            // Predicated region
            $region36: #{reverse} parent=23 // pred_check
              _
            $region37: #{reverse} parent=23 // pred_check_branch
              %65 = sbr.rel (0) target = $region39
            $region38: #{reverse} parent=23 // pred_region
              %s67 = ssub.s32 4, 1
              loop: start=0, step=1, limit=1
              $region40: #{reverse} parent=38 // loop_pre_header
                _
              $region41: #{reverse} parent=38 // loop_header
                %s69 = sphi 0, %s73
                %p70 = scmp.ge.s32.totalorder %s69, 1
                %s74 = sphi %s45, %s45
                %s75 = sphi %s40, %s40
              $region42: #{reverse} parent=38 // loop_header_branch
                %72 = sbr.rel (%p70) target = $region46
              $region43: #{reverse} parent=38 // loop_body
                %v76 = vld [vmem:[%s74] sm:%s67]
                %77 = vst [vmem:[%s75] sm:%s67] %v76
              $region44: #{reverse} parent=38 // loop_footer
                %s73 = sadd.s32 1, %s69
              $region45: #{reverse} parent=38 // loop_footer_branch
                %68 = sbr.rel target = $region41
              $region46: #{reverse} parent=38 // loop_exit
                _
            $region39: #{reverse} parent=23 // pred_fallthru
              _
          $region24: #{reverse} parent=19 // pred_fallthru
            _
          // Predicated region
          $region25: #{reverse} parent=19 // pred_check
            _
          $region26: #{reverse} parent=19 // pred_check_branch
            %51 = sbr.rel (0) target = $region28
          $region27: #{reverse} parent=19 // pred_region
            %s53 = ssub.s32 4, 1
            loop: start=0, step=1, limit=1
            $region29: #{reverse} parent=27 // loop_pre_header
              _
            $region30: #{reverse} parent=27 // loop_header
              %s55 = sphi 0, %s59
              %p56 = scmp.ge.s32.totalorder %s55, 1
              %s60 = sphi %s45, %s45
              %s61 = sphi %s40, %s40
            $region31: #{reverse} parent=27 // loop_header_branch
              %58 = sbr.rel (%p56) target = $region35
            $region32: #{reverse} parent=27 // loop_body
              %v62 = vld [vmem:[%s60] sm:%s53]
              %63 = vst [vmem:[%s61] sm:%s53] %v62
            $region33: #{reverse} parent=27 // loop_footer
              %s59 = sadd.s32 1, %s55
            $region34: #{reverse} parent=27 // loop_footer_branch
              %54 = sbr.rel target = $region30
            $region35: #{reverse} parent=27 // loop_exit
              _
          $region28: #{reverse} parent=19 // pred_fallthru
            _
        $region20: #{reverse} parent=15 // pred_fallthru
          _
        %78 = vnop
      $region16: #{reverse} parent=5 // pred_fallthru
        _
      %p79 = scmp.le.s32.totalorder 1, %s6
      %p80 = scmp.lt.s32.totalorder %s6, 3
      %p81 = pnand %p79, %p80
      %p82 = pneg %p81
      // Predicated region
      $region47: #{reverse} parent=5 // pred_check
        _
      $region48: #{reverse} parent=5 // pred_check_branch
        %84 = sbr.rel (%p81) target = $region50
      $region49: #{reverse} parent=5 // pred_region
        %s85 = ssub.s32 %s6, 1
        %s86 = sand.u32 %s11, 1
        %s87 = sand.u32 %s11, 1
        %s88 = smul.addr %s87, 2
        %s89 = scalar_lea.vmem [#allocation1], %s88
        %s90 = sand.u32 %s11, 1
        %s91 = sand.u32 %s11, 1
        %s92 = smul.addr %s91, 2
        %s93 = scalar_lea.vmem [#allocation1], %s92
        %s94 = sand.u32 %s11, 1
        %s95 = sand.u32 %s11, 1
        %s96 = smul.addr %s95, 2
        %s97 = scalar_lea.vmem [#allocation3], %s96
        %s99 = sshll.u32 1, 2
        %s100 = ssub.s32 %s99, 1
        %v101 = vld [vmem:[%s93] sm:%s100]
        %102 = vst [vmem:[#allocation0] sm:%s100] %v101
        %s103 = ssub.s32 1, %s16
        %v104 = vld [vmem:[#allocation0] sm:$0xff]
        %105 = vperm.xlu0 %4, %v104
        %v106 = vpop.permute.xlu0 %105
        %107 = vst [vmem:[#allocation2] sm:$0xff] %v106
        %s109 = sshll.u32 1, 2
        %s110 = ssub.s32 %s109, 1
        %v112 = vld [vmem:[#allocation2] sm:%s110]
        %s113 = sshll.u32 1, 2
        %s114 = ssub.s32 %s113, 1
        %115 = vst [vmem:[%s97] sm:%s114] %v112
        %s116 = sand.u32 %s11, 1
        %s117 = sand.u32 %s11, 1
        %s118 = smul.addr %s117, 2
        %s119 = scalar_lea.vmem [#allocation3], %s118
        %s120 = smul.addr %s15, 2
        %s121 = sadd.s32 %s16, %s120
        %s122 = smul.addr %s121, 2
        %s123 = scalar_lea.vmem %s1, %s122
        // Predicated region
        $region51: #{reverse} parent=49 // pred_check
          _
        $region52: #{reverse} parent=49 // pred_check_branch
          %125 = sbr.rel (0) target = $region54
        $region53: #{reverse} parent=49 // pred_region
          // Predicated region
          $region55: #{reverse} parent=53 // pred_check
            _
          $region56: #{reverse} parent=53 // pred_check_branch
            %127 = sbr.rel target = $region58
          $region57: #{reverse} parent=53 // pred_region
            // Predicated region
            $region70: #{reverse} parent=57 // pred_check
              _
            $region71: #{reverse} parent=57 // pred_check_branch
              %143 = sbr.rel (0) target = $region73
            $region72: #{reverse} parent=57 // pred_region
              %s145 = ssub.s32 4, 1
              loop: start=0, step=1, limit=1
              $region74: #{reverse} parent=72 // loop_pre_header
                _
              $region75: #{reverse} parent=72 // loop_header
                %s147 = sphi 0, %s151
                %p148 = scmp.ge.s32.totalorder %s147, 1
                %s152 = sphi %s119, %s119
                %s153 = sphi %s123, %s123
              $region76: #{reverse} parent=72 // loop_header_branch
                %150 = sbr.rel (%p148) target = $region80
              $region77: #{reverse} parent=72 // loop_body
                %v154 = vld [vmem:[%s152] sm:%s145]
                %155 = vst [vmem:[%s153] sm:%s145] %v154
              $region78: #{reverse} parent=72 // loop_footer
                %s151 = sadd.s32 1, %s147
              $region79: #{reverse} parent=72 // loop_footer_branch
                %146 = sbr.rel target = $region75
              $region80: #{reverse} parent=72 // loop_exit
                _
            $region73: #{reverse} parent=57 // pred_fallthru
              _
          $region58: #{reverse} parent=53 // pred_fallthru
            _
          // Predicated region
          $region59: #{reverse} parent=53 // pred_check
            _
          $region60: #{reverse} parent=53 // pred_check_branch
            %129 = sbr.rel (0) target = $region62
          $region61: #{reverse} parent=53 // pred_region
            %s131 = ssub.s32 4, 1
            loop: start=0, step=1, limit=1
            $region63: #{reverse} parent=61 // loop_pre_header
              _
            $region64: #{reverse} parent=61 // loop_header
              %s133 = sphi 0, %s137
              %p134 = scmp.ge.s32.totalorder %s133, 1
              %s138 = sphi %s119, %s119
              %s139 = sphi %s123, %s123
            $region65: #{reverse} parent=61 // loop_header_branch
              %136 = sbr.rel (%p134) target = $region69
            $region66: #{reverse} parent=61 // loop_body
              %v140 = vld [vmem:[%s138] sm:%s131]
              %141 = vst [vmem:[%s139] sm:%s131] %v140
            $region67: #{reverse} parent=61 // loop_footer
              %s137 = sadd.s32 1, %s133
            $region68: #{reverse} parent=61 // loop_footer_branch
              %132 = sbr.rel target = $region64
            $region69: #{reverse} parent=61 // loop_exit
              _
          $region62: #{reverse} parent=53 // pred_fallthru
            _
        $region54: #{reverse} parent=49 // pred_fallthru
          _
        %156 = vnop
      $region50: #{reverse} parent=5 // pred_fallthru
        _
      %p157 = scmp.le.s32.totalorder 2, %s6
      // Predicated region
      $region81: #{reverse} parent=5 // pred_check
        %p158 = pneg %p157
      $region82: #{reverse} parent=5 // pred_check_branch
        %160 = sbr.rel (%p158) target = $region84
      $region83: #{reverse} parent=5 // pred_region
        %s161 = ssub.s32 %s6, 2
        %s162 = sand.u32 %s12, 1
        %s163 = sand.u32 %s12, 1
        %s164 = smul.addr %s163, 2
        %s165 = scalar_lea.vmem [#allocation3], %s164
      $region84: #{reverse} parent=5 // pred_fallthru
        _
    $region6: #{reverse} parent=1 // loop_footer
      %s10 = sadd.s32 1, %s6
    $region7: #{reverse} parent=1 // loop_footer_branch
      %5 = sbr.rel target = $region3
    $region8: #{reverse} parent=1 // loop_exit
      _

// kernel: variational_encoder_forward.3
$region0: #{variational_encoder_forward.3}
  #allocation0 [shape = 'u32[]', space=smem, size = 0x4, offset = 0x4, fixed_abs, tag = 'smem constant byte address 0x4 - core index']
  #allocation1 [shape = 'u32[144,128]{1,0:T(1,128)}', space=vmem, size = 0x12000, scoped, tag = 'internal scratch']
  %s0 = inlined_call_operand.vmem [shape: f32[128,30], index: 0, kind: input, shape index: {}]
  %s1 = inlined_call_operand.vmem [shape: f32[1,30], index: 1, kind: input, shape index: {}]
  %s2 = inlined_call_operand.vmem [shape: f32[1,30], index: 2, kind: input, shape index: {}]
  %s3 = inlined_call_operand.vmem [shape: f32[30,384], index: 3, kind: input, shape index: {}]
  %s4 = inlined_call_operand.vmem [shape: f32[1,384], index: 4, kind: input, shape index: {}]
  %s5 = inlined_call_operand.vmem [shape: f32[128,384], index: 5, kind: output, shape index: {}]
  %s6 = sld [smem:[#allocation0]]
  $region53: #{variational_encoder_forward.3} parent=0
    _
  %s8 = ssub.s32 1, %s6
  %s9 = scalar_select 0, %s8, %s6
  loop: start=0, step=1, limit=4
  $region2: #{variational_encoder_forward.3} parent=0 // loop_pre_header
    _
  $region3: #{variational_encoder_forward.3} parent=0 // loop_header
    %s11 = sphi 0, %s15
    %p12 = scmp.ge.s32.totalorder %s11, 4
    %s21 = sphi 0, %s23
    %s24 = sphi 0, %s21
    %s25 = sphi 0, %s24
    %s41 = sphi 0, %s25
    %s45 = sphi 0, %s45
    %s47 = sphi 0, %s45
    %s48 = sphi 0, %s47
    %s62 = sphi 0, %s48
    %s66 = sphi 0, %s66
    %s68 = sphi 0, %s66
    %s69 = sphi 0, %s68
    %s83 = sphi 0, %s69
    %s87 = sphi 0, %s87
    %s89 = sphi 0, %s87
    %s90 = sphi 0, %s89
    %s104 = sphi 0, %s90
    %s108 = sphi 0, %s108
    %s110 = sphi 0, %s108
    %s111 = sphi 0, %s110
    %s125 = sphi 0, %s111
    %s131 = sphi 0, %s133
    %s134 = sphi 0, %s131
    %s135 = sphi 0, %s134
    %s151 = sphi 0, %s135
  $region4: #{variational_encoder_forward.3} parent=0 // loop_header_branch
    %14 = sbr.rel (%p12) target = $region8
  $region5: #{variational_encoder_forward.3} parent=0 // loop_body
    %s16 = ssub.s32 %s11, 1
    %s17 = ssub.s32 %s11, 2
    %s18 = sadd.s32 %s11, 1
    %s19 = ssub.s32 %s11, %s18
    %p20 = scmp.eq.s32.totalorder %s19, 0
    %s22 = sadd.s32 %s21, 1
    %s23 = scalar_select %p20, %s21, %s22
    %p26 = pneg %p20
    %p27 = scmp.eq.s32.totalorder %s11, 1
    %p28 = por %p26, %p27
    %p29 = scmp.ne.s32.totalorder %s21, %s24
    %p30 = scmp.eq.s32.totalorder %s11, 0
    %p31 = por %p29, %p30
    %p32 = scmp.ne.s32.totalorder %s21, %s24
    %p33 = scmp.eq.s32.totalorder %s16, 1
    %p34 = por %p32, %p33
    %p35 = scmp.ne.s32.totalorder %s24, %s25
    %p36 = scmp.eq.s32.totalorder %s16, 0
    %p37 = por %p35, %p36
    %p38 = scmp.ne.s32.totalorder %s24, %s25
    %p39 = scmp.eq.s32.totalorder %s17, 1
    %p40 = por %p38, %p39
    %p42 = scmp.ne.s32.totalorder %s25, %s41
    %p43 = scmp.eq.s32.totalorder %s17, 0
    %p44 = por %p42, %p43
    %s46 = sadd.s32 %s45, 1
    %p49 = scmp.eq.s32.totalorder %s11, 1
    %p50 = scmp.ne.s32.totalorder %s45, %s47
    %p51 = scmp.eq.s32.totalorder %s11, 0
    %p52 = por %p50, %p51
    %p53 = scmp.ne.s32.totalorder %s45, %s47
    %p54 = scmp.eq.s32.totalorder %s16, 1
    %p55 = por %p53, %p54
    %p56 = scmp.ne.s32.totalorder %s47, %s48
    %p57 = scmp.eq.s32.totalorder %s16, 0
    %p58 = por %p56, %p57
    %p59 = scmp.ne.s32.totalorder %s47, %s48
    %p60 = scmp.eq.s32.totalorder %s17, 1
    %p61 = por %p59, %p60
    %p63 = scmp.ne.s32.totalorder %s48, %s62
    %p64 = scmp.eq.s32.totalorder %s17, 0
    %p65 = por %p63, %p64
    %s67 = sadd.s32 %s66, 1
    %p70 = scmp.eq.s32.totalorder %s11, 1
    %p71 = scmp.ne.s32.totalorder %s66, %s68
    %p72 = scmp.eq.s32.totalorder %s11, 0
    %p73 = por %p71, %p72
    %p74 = scmp.ne.s32.totalorder %s66, %s68
    %p75 = scmp.eq.s32.totalorder %s16, 1
    %p76 = por %p74, %p75
    %p77 = scmp.ne.s32.totalorder %s68, %s69
    %p78 = scmp.eq.s32.totalorder %s16, 0
    %p79 = por %p77, %p78
    %p80 = scmp.ne.s32.totalorder %s68, %s69
    %p81 = scmp.eq.s32.totalorder %s17, 1
    %p82 = por %p80, %p81
    %p84 = scmp.ne.s32.totalorder %s69, %s83
    %p85 = scmp.eq.s32.totalorder %s17, 0
    %p86 = por %p84, %p85
    %s88 = sadd.s32 %s87, 1
    %p91 = scmp.eq.s32.totalorder %s11, 1
    %p92 = scmp.ne.s32.totalorder %s87, %s89
    %p93 = scmp.eq.s32.totalorder %s11, 0
    %p94 = por %p92, %p93
    %p95 = scmp.ne.s32.totalorder %s87, %s89
    %p96 = scmp.eq.s32.totalorder %s16, 1
    %p97 = por %p95, %p96
    %p98 = scmp.ne.s32.totalorder %s89, %s90
    %p99 = scmp.eq.s32.totalorder %s16, 0
    %p100 = por %p98, %p99
    %p101 = scmp.ne.s32.totalorder %s89, %s90
    %p102 = scmp.eq.s32.totalorder %s17, 1
    %p103 = por %p101, %p102
    %p105 = scmp.ne.s32.totalorder %s90, %s104
    %p106 = scmp.eq.s32.totalorder %s17, 0
    %p107 = por %p105, %p106
    %s109 = sadd.s32 %s108, 1
    %p112 = scmp.eq.s32.totalorder %s11, 1
    %p113 = scmp.ne.s32.totalorder %s108, %s110
    %p114 = scmp.eq.s32.totalorder %s11, 0
    %p115 = por %p113, %p114
    %p116 = scmp.ne.s32.totalorder %s108, %s110
    %p117 = scmp.eq.s32.totalorder %s16, 1
    %p118 = por %p116, %p117
    %p119 = scmp.ne.s32.totalorder %s110, %s111
    %p120 = scmp.eq.s32.totalorder %s16, 0
    %p121 = por %p119, %p120
    %p122 = scmp.ne.s32.totalorder %s110, %s111
    %p123 = scmp.eq.s32.totalorder %s17, 1
    %p124 = por %p122, %p123
    %p126 = scmp.ne.s32.totalorder %s111, %s125
    %p127 = scmp.eq.s32.totalorder %s17, 0
    %p128 = por %p126, %p127
    %s129 = ssub.s32 %s11, %s18
    %p130 = scmp.eq.s32.totalorder %s129, 0
    %s132 = sadd.s32 %s131, 1
    %s133 = scalar_select %p130, %s131, %s132
    %p136 = pneg %p130
    %p137 = scmp.eq.s32.totalorder %s11, 1
    %p138 = por %p136, %p137
    %p139 = scmp.ne.s32.totalorder %s131, %s134
    %p140 = scmp.eq.s32.totalorder %s11, 0
    %p141 = por %p139, %p140
    %p142 = scmp.ne.s32.totalorder %s131, %s134
    %p143 = scmp.eq.s32.totalorder %s16, 1
    %p144 = por %p142, %p143
    %p145 = scmp.ne.s32.totalorder %s134, %s135
    %p146 = scmp.eq.s32.totalorder %s16, 0
    %p147 = por %p145, %p146
    %p148 = scmp.ne.s32.totalorder %s134, %s135
    %p149 = scmp.eq.s32.totalorder %s17, 1
    %p150 = por %p148, %p149
    %p152 = scmp.ne.s32.totalorder %s135, %s151
    %p153 = scmp.eq.s32.totalorder %s17, 0
    %p154 = por %p152, %p153
    %p155 = scmp.le.s32.totalorder 1, %s11
    %p156 = scmp.lt.s32.totalorder %s11, 3
    %p157 = pnand %p155, %p156
    %p158 = pneg %p157
    // Predicated region
    $region9: #{variational_encoder_forward.3} parent=5 // pred_check
      _
    $region10: #{variational_encoder_forward.3} parent=5 // pred_check_branch
      %160 = sbr.rel (%p157) target = $region12
    $region11: #{variational_encoder_forward.3} parent=5 // pred_region
      %s161 = ssub.s32 %s11, 1
      // Predicated region
      $region13: #{variational_encoder_forward.3} parent=11 // pred_check
        %p162 = pneg %p58
      $region14: #{variational_encoder_forward.3} parent=11 // pred_check_branch
        %164 = sbr.rel (%p162) target = $region16
      $region15: #{variational_encoder_forward.3} parent=11 // pred_region
        _
      $region16: #{variational_encoder_forward.3} parent=11 // pred_fallthru
        _
      // Predicated region
      $region17: #{variational_encoder_forward.3} parent=11 // pred_check
        %p165 = pneg %p79
      $region18: #{variational_encoder_forward.3} parent=11 // pred_check_branch
        %167 = sbr.rel (%p165) target = $region20
      $region19: #{variational_encoder_forward.3} parent=11 // pred_region
        _
      $region20: #{variational_encoder_forward.3} parent=11 // pred_fallthru
        _
      // Predicated region
      $region21: #{variational_encoder_forward.3} parent=11 // pred_check
        %p168 = pneg %p100
      $region22: #{variational_encoder_forward.3} parent=11 // pred_check_branch
        %170 = sbr.rel (%p168) target = $region24
      $region23: #{variational_encoder_forward.3} parent=11 // pred_region
        _
      $region24: #{variational_encoder_forward.3} parent=11 // pred_fallthru
        _
      // Predicated region
      $region25: #{variational_encoder_forward.3} parent=11 // pred_check
        %p171 = pneg %p121
      $region26: #{variational_encoder_forward.3} parent=11 // pred_check_branch
        %173 = sbr.rel (%p171) target = $region28
      $region27: #{variational_encoder_forward.3} parent=11 // pred_region
        _
      $region28: #{variational_encoder_forward.3} parent=11 // pred_fallthru
        _
    $region12: #{variational_encoder_forward.3} parent=5 // pred_fallthru
      _
    %p174 = scmp.lt.s32.totalorder %s11, 2
    // Predicated region
    $region29: #{variational_encoder_forward.3} parent=5 // pred_check
      %p175 = pneg %p174
    $region30: #{variational_encoder_forward.3} parent=5 // pred_check_branch
      %177 = sbr.rel (%p175) target = $region32
    $region31: #{variational_encoder_forward.3} parent=5 // pred_region
      // Predicated region
      $region33: #{variational_encoder_forward.3} parent=31 // pred_check
        %p178 = pneg %p31
      $region34: #{variational_encoder_forward.3} parent=31 // pred_check_branch
        %180 = sbr.rel (%p178) target = $region36
      $region35: #{variational_encoder_forward.3} parent=31 // pred_region
        %s181 = smul.u32 8, %s11
        %p182 = scmp.lt.s32.totalorder %s181, 15
        %s183 = scalar_select %p182, %s181, 15
        %s184 = smul.addr %s183, 8
        %s185 = scalar_lea.vmem %s0, %s184
        %s186 = smul.u32 8, %s11
      $region36: #{variational_encoder_forward.3} parent=31 // pred_fallthru
        _
    $region32: #{variational_encoder_forward.3} parent=5 // pred_fallthru
      _
    %p187 = scmp.le.s32.totalorder 1, %s11
    %p188 = scmp.lt.s32.totalorder %s11, 3
    %p189 = pnand %p187, %p188
    %p190 = pneg %p189
    // Predicated region
    $region37: #{variational_encoder_forward.3} parent=5 // pred_check
      _
    $region38: #{variational_encoder_forward.3} parent=5 // pred_check_branch
      %192 = sbr.rel (%p189) target = $region40
    $region39: #{variational_encoder_forward.3} parent=5 // pred_region
      %s193 = ssub.s32 %s11, 1
      %s194 = smul.u32 8, %s16
      %p195 = scmp.lt.s32.totalorder %s194, 15
      %s196 = scalar_select %p195, %s194, 15
      %s197 = smul.addr %s196, 8
      %s198 = scalar_lea.vmem %s0, %s197
      %p199 = pneg %p37
      %p200 = pneg %p34
      %p201 = pneg %p58
      %p202 = pneg %p55
      %p203 = pneg %p79
      %p204 = pneg %p76
      %p205 = pneg %p100
      %p206 = pneg %p97
      %p207 = pneg %p121
      %p208 = pneg %p118
      %p209 = pneg %p147
      %p210 = pneg %p144
      %s211 = smul.u32 8, %s16
      %p212 = scmp.lt.s32.totalorder %s211, 15
      %s213 = scalar_select %p212, %s211, 15
      %s214 = smul.addr %s213, 3
      %s215 = smul.addr %s214, 8
      %s216 = scalar_lea.vmem %s5, %s215
      %s217 = smul.u32 8, %s16
      %p218 = scmp.lt.s32.totalorder %s217, 15
      %s219 = scalar_select %p218, %s217, 15
      %s220 = smul.addr %s219, 8
      %s221 = scalar_lea.vmem %s0, %s220
      %s222 = smul.u32 8, %s16
      %s223 = smul.u32 8, %s16
      %p224 = scmp.lt.s32.totalorder %s223, 15
      %s225 = scalar_select %p224, %s223, 15
      %s226 = smul.addr %s225, 3
      %s227 = smul.addr %s226, 8
      %s228 = scalar_lea.vmem %s5, %s227
      %s229 = smul.u32 8, %s16
      %v231 = vld [vmem:[%s221] sm:$0xff]
      %v232 = vld [vmem:[%s221 + $0x8] sm:$0xff]
      %v233 = vld [vmem:[%s221 + $0x10] sm:$0xff]
      %v234 = vld [vmem:[%s221 + $0x18] sm:$0xff]
      %v235 = vld [vmem:[%s221 + $0x20] sm:$0xff]
      %v236 = vld [vmem:[%s221 + $0x28] sm:$0xff]
      %v237 = vld [vmem:[%s221 + $0x30] sm:$0xff]
      %v238 = vld [vmem:[%s221 + $0x38] sm:$0xff]
      %v239 = vld [vmem:[%s1] sm:$0x1]
      %v240 = vld [vmem:[%s2] sm:$0x1]
      %vm241 = vcmask 244736
      %v242 = vsel %vm241, %v231, 0.0
      %243 = vadd.xlane.f32.xlu0 %v242
      %v244 = vpop.xlane.xlu0 %243
      %v245 = vsel %vm241, %v232, 0.0
      %246 = vadd.xlane.f32.xlu0 %v245
      %v247 = vpop.xlane.xlu0 %246
      %v248 = vsel %vm241, %v233, 0.0
      %249 = vadd.xlane.f32.xlu0 %v248
      %v250 = vpop.xlane.xlu0 %249
      %v251 = vsel %vm241, %v234, 0.0
      %252 = vadd.xlane.f32.xlu0 %v251
      %v253 = vpop.xlane.xlu0 %252
      %v254 = vsel %vm241, %v235, 0.0
      %255 = vadd.xlane.f32.xlu0 %v254
      %v256 = vpop.xlane.xlu0 %255
      %v257 = vsel %vm241, %v236, 0.0
      %258 = vadd.xlane.f32.xlu0 %v257
      %v259 = vpop.xlane.xlu0 %258
      %v260 = vsel %vm241, %v237, 0.0
      %261 = vadd.xlane.f32.xlu0 %v260
      %v262 = vpop.xlane.xlu0 %261
      %v263 = vsel %vm241, %v238, 0.0
      %264 = vadd.xlane.f32.xlu0 %v263
      %v265 = vpop.xlane.xlu0 %264
      %v266 = vrcp.pop 30.0
      %v267 = vmul.f32 %v244, %v266
      %v268 = vmul.f32 %v247, %v266
      %v269 = vmul.f32 %v250, %v266
      %v270 = vmul.f32 %v253, %v266
      %v271 = vmul.f32 %v256, %v266
      %v272 = vmul.f32 %v259, %v266
      %v273 = vmul.f32 %v262, %v266
      %v274 = vmul.f32 %v265, %v266
      %v275 = vsub.f32 %v231, %v267
      %v276 = vsub.f32 %v232, %v268
      %v277 = vsub.f32 %v233, %v269
      %v278 = vsub.f32 %v234, %v270
      %v279 = vsub.f32 %v235, %v271
      %v280 = vsub.f32 %v236, %v272
      %v281 = vsub.f32 %v237, %v273
      %v282 = vsub.f32 %v238, %v274
      %v283 = vmul.f32 %v275, %v275
      %v284 = vmul.f32 %v276, %v276
      %v285 = vmul.f32 %v277, %v277
      %v286 = vmul.f32 %v278, %v278
      %v287 = vmul.f32 %v279, %v279
      %v288 = vmul.f32 %v280, %v280
      %v289 = vmul.f32 %v281, %v281
      %v290 = vmul.f32 %v282, %v282
      %v291 = vsel %vm241, %v283, 0.0
      %292 = vadd.xlane.f32.xlu0 %v291
      %v293 = vpop.xlane.xlu0 %292
      %v294 = vsel %vm241, %v284, 0.0
      %295 = vadd.xlane.f32.xlu0 %v294
      %v296 = vpop.xlane.xlu0 %295
      %v297 = vsel %vm241, %v285, 0.0
      %298 = vadd.xlane.f32.xlu0 %v297
      %v299 = vpop.xlane.xlu0 %298
      %v300 = vsel %vm241, %v286, 0.0
      %301 = vadd.xlane.f32.xlu0 %v300
      %v302 = vpop.xlane.xlu0 %301
      %v303 = vsel %vm241, %v287, 0.0
      %304 = vadd.xlane.f32.xlu0 %v303
      %v305 = vpop.xlane.xlu0 %304
      %v306 = vsel %vm241, %v288, 0.0
      %307 = vadd.xlane.f32.xlu0 %v306
      %v308 = vpop.xlane.xlu0 %307
      %v309 = vsel %vm241, %v289, 0.0
      %310 = vadd.xlane.f32.xlu0 %v309
      %v311 = vpop.xlane.xlu0 %310
      %v312 = vsel %vm241, %v290, 0.0
      %313 = vadd.xlane.f32.xlu0 %v312
      %v314 = vpop.xlane.xlu0 %313
      %v315 = vmul.f32 %v293, %v266
      %v316 = vmul.f32 %v296, %v266
      %v317 = vmul.f32 %v299, %v266
      %v318 = vmul.f32 %v302, %v266
      %v319 = vmul.f32 %v305, %v266
      %v320 = vmul.f32 %v308, %v266
      %v321 = vmul.f32 %v311, %v266
      %v322 = vmul.f32 %v314, %v266
      %v323 = vadd.f32 %v315, 1e-05
      %v324 = vadd.f32 %v316, 1e-05
      %v325 = vadd.f32 %v317, 1e-05
      %v326 = vadd.f32 %v318, 1e-05
      %v327 = vadd.f32 %v319, 1e-05
      %v328 = vadd.f32 %v320, 1e-05
      %v329 = vadd.f32 %v321, 1e-05
      %v330 = vadd.f32 %v322, 1e-05
      %v331 = vrsqrt.pop %v323
      %v332 = vrsqrt.pop %v324
      %v333 = vrsqrt.pop %v325
      %v334 = vrsqrt.pop %v326
      %v335 = vrsqrt.pop %v327
      %v336 = vrsqrt.pop %v328
      %v337 = vrsqrt.pop %v329
      %v338 = vrsqrt.pop %v330
      %v339 = vmul.f32 %v275, %v331
      %v340 = vmul.f32 %v276, %v332
      %v341 = vmul.f32 %v277, %v333
      %v342 = vmul.f32 %v278, %v334
      %v343 = vmul.f32 %v279, %v335
      %v344 = vmul.f32 %v280, %v336
      %v345 = vmul.f32 %v281, %v337
      %v346 = vmul.f32 %v282, %v338
      %v348 = vlaneseq
      %v349 = vshrl.u32 %v348, 7
      %v350 = vsub.s32 0, %v349
      %v351 = vrot.slane %v239, %v350
      %v353 = vmul.f32 %v339, %v351
      %v354 = vmul.f32 %v340, %v351
      %v355 = vmul.f32 %v341, %v351
      %v356 = vmul.f32 %v342, %v351
      %v357 = vmul.f32 %v343, %v351
      %v358 = vmul.f32 %v344, %v351
      %v359 = vmul.f32 %v345, %v351
      %v360 = vmul.f32 %v346, %v351
      %v362 = vlaneseq
      %v363 = vshrl.u32 %v362, 7
      %v364 = vsub.s32 0, %v363
      %v365 = vrot.slane %v240, %v364
      %v367 = vadd.f32 %v353, %v365
      %v368 = vadd.f32 %v354, %v365
      %v369 = vadd.f32 %v355, %v365
      %v370 = vadd.f32 %v356, %v365
      %v371 = vadd.f32 %v357, %v365
      %v372 = vadd.f32 %v358, %v365
      %v373 = vadd.f32 %v359, %v365
      %v374 = vadd.f32 %v360, %v365
      %v375 = vld [vmem:[%s3] sm:$0xff]
      %v376 = vld [vmem:[%s3 + $0x8] sm:$0xff]
      %v377 = vld [vmem:[%s3 + $0x10] sm:$0xff]
      %v378 = vld [vmem:[%s3 + $0x18] sm:$0xff]
      %v379 = vld [vmem:[%s3 + $0x20] sm:$0xff]
      %v380 = vld [vmem:[%s3 + $0x28] sm:$0xff]
      %v381 = vld [vmem:[%s3 + $0x30] sm:$0xff]
      %v382 = vld [vmem:[%s3 + $0x38] sm:$0xff]
      %v383 = vld [vmem:[%s3 + $0x40] sm:$0xff]
      %v384 = vld [vmem:[%s3 + $0x48] sm:$0x3f]
      %v385 = vld [vmem:[%s3 + $0x50] sm:$0x3f]
      %v386 = vld [vmem:[%s3 + $0x58] sm:$0x3f]
      %v387 = vpack.c.bf16 %v368, %v367
      %v388 = vpack.c.bf16 %v370, %v369
      %v389 = vpack.c.bf16 %v372, %v371
      %v390 = vpack.c.bf16 %v374, %v373
      %v391 = vpack.c.bf16 %v378, %v375
      %v392 = vpack.c.bf16 %v379, %v376
      %v393 = vpack.c.bf16 %v380, %v377
      %v394 = vpack.c.bf16 %v384, %v381
      %v395 = vpack.c.bf16 %v385, %v382
      %v396 = vpack.c.bf16 %v386, %v383
      %v397 = vld [vmem:[%s4] sm:$0x7]
      %v399 = vlaneseq
      %v400 = vshrl.u32 %v399, 7
      %v401 = vsub.s32 0, %v400
      %v402 = vrot.slane %v397, %v401
      %v403 = vlaneseq
      %v404 = vshrl.u32 %v403, 7
      %v405 = vsub.s32 1, %v404
      %v406 = vrot.slane %v397, %v405
      %v407 = vlaneseq
      %v408 = vshrl.u32 %v407, 7
      %v409 = vsub.s32 2, %v408
      %v410 = vrot.slane %v397, %v409
      %v415 = vsel %vm241, %v387, 0
      %v418 = vsel %vm241, %v388, 0
      %v421 = vsel %vm241, %v389, 0
      %v424 = vsel %vm241, %v390, 0
      %vm426 = vcmask 1046528
      %v428 = vsel %vm426, %v394, 0
      %v431 = vsel %vm426, %v395, 0
      %v434 = vsel %vm426, %v396, 0
      %436 = vmatprep.subr.bf16.mxu0 0
      %437 = vmatpush1.bf16.msra.mxu0 0
      %438 = vmatprep.subr.bf16.mxu0 0
      %439 = vmatpush1.bf16.msra.mxu0 0
      %440 = vmatprep.subr.bf16.mxu0 0
      %441 = vmatpush1.bf16.msra.mxu0 0
      %442 = vmatprep.subr.bf16.mxu0 0
      %443 = vmatpush1.bf16.msra.mxu0 0
      %444 = vmatprep.subr.bf16.mxu0 0
      %445 = vmatpush1.bf16.msra.mxu0 0
      %446 = vmatprep.subr.bf16.mxu0 0
      %447 = vmatpush1.bf16.msra.mxu0 0
      %448 = vmatprep.subr.bf16.mxu0 %v431
      %449 = vmatpush1.bf16.msra.mxu0 %v428
      %450 = vmatprep.subr.bf16.mxu0 %v392
      %451 = vmatpush1.bf16.msra.mxu0 %v391
      %452 = vmatprep.subr.bf16.mxu0 0
      %453 = vmatpush2.bf16.msra.mxu0 0
      %454 = vmatprep.subr.bf16.mxu0 0
      %455 = vmatpush2.bf16.msra.mxu0 0
      %456 = vmatprep.subr.bf16.mxu0 0
      %457 = vmatpush2.bf16.msra.mxu0 0
      %458 = vmatprep.subr.bf16.mxu0 0
      %459 = vmatpush2.bf16.msra.mxu0 0
      %460 = vmatprep.subr.bf16.mxu0 0
      %461 = vmatpush2.bf16.msra.mxu0 0
      %462 = vmatprep.subr.bf16.mxu0 0
      %463 = vmatpush2.bf16.msra.mxu0 0
      %464 = vmatprep.subr.bf16.mxu0 0
      %465 = vmatpush2.bf16.msra.mxu0 0
      %466 = vmatprep.subr.bf16.mxu0 0
      %467 = vmatpush2.bf16.msra.mxu0 0
      %468 = vmatprep.mubr.bf16.mxu0 0
      %469 = vmatmul.mubr.bf16.gmra.mxu0 %v415
      %v470 = vpop.f32.mrf.mxu0
      %v471 = vadd.f32 %v402, %v470
      %v472 = vpop.f32.mrf.mxu0
      %v473 = vadd.f32 %v406, %v472
      %v474 = vpop.f32.mrf.mxu0
      %v475 = vadd.f32 %v402, %v474
      %v476 = vpop.f32.mrf.mxu0
      %v477 = vadd.f32 %v406, %v476
      %478 = vmatprep.mubr.bf16.mxu0 0
      %479 = vmatmul.mubr.bf16.gmra.mxu0 %v418
      %v480 = vpop.f32.mrf.mxu0
      %v481 = vadd.f32 %v402, %v480
      %v482 = vpop.f32.mrf.mxu0
      %v483 = vadd.f32 %v406, %v482
      %v484 = vpop.f32.mrf.mxu0
      %v485 = vadd.f32 %v402, %v484
      %v486 = vpop.f32.mrf.mxu0
      %v487 = vadd.f32 %v406, %v486
      %488 = vmatprep.mubr.bf16.mxu0 0
      %489 = vmatmul.mubr.bf16.gmra.mxu0 %v421
      %v490 = vpop.f32.mrf.mxu0
      %v491 = vadd.f32 %v402, %v490
      %v492 = vpop.f32.mrf.mxu0
      %v493 = vadd.f32 %v406, %v492
      %v494 = vpop.f32.mrf.mxu0
      %v495 = vadd.f32 %v402, %v494
      %v496 = vpop.f32.mrf.mxu0
      %v497 = vadd.f32 %v406, %v496
      %498 = vmatprep.mubr.bf16.mxu0 0
      %499 = vmatmul.mubr.bf16.gmra.mxu0 %v424
      %v500 = vpop.f32.mrf.mxu0
      %v501 = vadd.f32 %v402, %v500
      %v502 = vpop.f32.mrf.mxu0
      %v503 = vadd.f32 %v406, %v502
      %v504 = vpop.f32.mrf.mxu0
      %v505 = vadd.f32 %v402, %v504
      %v506 = vpop.f32.mrf.mxu0
      %v507 = vadd.f32 %v406, %v506
      %508 = vdwg.mxu0
      %509 = vmatprep.subr.bf16.mxu0 0
      %510 = vmatpush1.bf16.msra.mxu0 0
      %511 = vmatprep.subr.bf16.mxu0 0
      %512 = vmatpush1.bf16.msra.mxu0 0
      %513 = vmatprep.subr.bf16.mxu0 0
      %514 = vmatpush1.bf16.msra.mxu0 0
      %515 = vmatprep.subr.bf16.mxu0 0
      %516 = vmatpush1.bf16.msra.mxu0 0
      %517 = vmatprep.subr.bf16.mxu0 0
      %518 = vmatpush1.bf16.msra.mxu0 0
      %519 = vmatprep.subr.bf16.mxu0 0
      %520 = vmatpush1.bf16.msra.mxu0 0
      %521 = vmatprep.subr.bf16.mxu0 0
      %522 = vmatpush1.bf16.msra.mxu0 %v434
      %523 = vmatprep.subr.bf16.mxu0 0
      %524 = vmatpush1.bf16.msra.mxu0 %v393
      %525 = vmatprep.subr.bf16.mxu0 0
      %526 = vmatpush2.bf16.msra.mxu0 0
      %527 = vmatprep.subr.bf16.mxu0 0
      %528 = vmatpush2.bf16.msra.mxu0 0
      %529 = vmatprep.subr.bf16.mxu0 0
      %530 = vmatpush2.bf16.msra.mxu0 0
      %531 = vmatprep.subr.bf16.mxu0 0
      %532 = vmatpush2.bf16.msra.mxu0 0
      %533 = vmatprep.subr.bf16.mxu0 0
      %534 = vmatpush2.bf16.msra.mxu0 0
      %535 = vmatprep.subr.bf16.mxu0 0
      %536 = vmatpush2.bf16.msra.mxu0 0
      %537 = vmatprep.subr.bf16.mxu0 0
      %538 = vmatpush2.bf16.msra.mxu0 0
      %539 = vmatprep.subr.bf16.mxu0 0
      %540 = vmatpush2.bf16.msra.mxu0 0
      %541 = vmatprep.mubr.bf16.mxu0 0
      %542 = vmatmul.mubr.bf16.gmra.mxu0 %v415
      %v543 = vpop.f32.mrf.mxu0
      %v544 = vadd.f32 %v410, %v543
      %v545 = vpop.f32.mrf.mxu0
      %v546 = vpop.f32.mrf.mxu0
      %v547 = vadd.f32 %v410, %v546
      %v548 = vpop.f32.mrf.mxu0
      %549 = vmatprep.mubr.bf16.mxu0 0
      %550 = vmatmul.mubr.bf16.gmra.mxu0 %v418
      %v551 = vpop.f32.mrf.mxu0
      %v552 = vadd.f32 %v410, %v551
      %v553 = vpop.f32.mrf.mxu0
      %v554 = vpop.f32.mrf.mxu0
      %v555 = vadd.f32 %v410, %v554
      %v556 = vpop.f32.mrf.mxu0
      %557 = vmatprep.mubr.bf16.mxu0 0
      %558 = vmatmul.mubr.bf16.gmra.mxu0 %v421
      %v559 = vpop.f32.mrf.mxu0
      %v560 = vadd.f32 %v410, %v559
      %v561 = vpop.f32.mrf.mxu0
      %v562 = vpop.f32.mrf.mxu0
      %v563 = vadd.f32 %v410, %v562
      %v564 = vpop.f32.mrf.mxu0
      %565 = vmatprep.mubr.bf16.mxu0 0
      %566 = vmatmul.mubr.bf16.gmra.mxu0 %v424
      %v567 = vpop.f32.mrf.mxu0
      %v568 = vadd.f32 %v410, %v567
      %v569 = vpop.f32.mrf.mxu0
      %v570 = vpop.f32.mrf.mxu0
      %v571 = vadd.f32 %v410, %v570
      %v572 = vpop.f32.mrf.mxu0
      %573 = vdwg.mxu0
      %574 = vst [vmem:[%s228] sm:$0xff] %v471
      %575 = vst [vmem:[%s228 + $0x8] sm:$0xff] %v473
      %576 = vst [vmem:[%s228 + $0x10] sm:$0xff] %v544
      %577 = vst [vmem:[%s228 + $0x18] sm:$0xff] %v475
      %578 = vst [vmem:[%s228 + $0x20] sm:$0xff] %v477
      %579 = vst [vmem:[%s228 + $0x28] sm:$0xff] %v547
      %580 = vst [vmem:[%s228 + $0x30] sm:$0xff] %v481
      %581 = vst [vmem:[%s228 + $0x38] sm:$0xff] %v483
      %582 = vst [vmem:[%s228 + $0x40] sm:$0xff] %v552
      %583 = vst [vmem:[%s228 + $0x48] sm:$0xff] %v485
      %584 = vst [vmem:[%s228 + $0x50] sm:$0xff] %v487
      %585 = vst [vmem:[%s228 + $0x58] sm:$0xff] %v555
      %586 = vst [vmem:[%s228 + $0x60] sm:$0xff] %v491
      %587 = vst [vmem:[%s228 + $0x68] sm:$0xff] %v493
      %588 = vst [vmem:[%s228 + $0x70] sm:$0xff] %v560
      %589 = vst [vmem:[%s228 + $0x78] sm:$0xff] %v495
      %590 = vst [vmem:[%s228 + $0x80] sm:$0xff] %v497
      %591 = vst [vmem:[%s228 + $0x88] sm:$0xff] %v563
      %592 = vst [vmem:[%s228 + $0x90] sm:$0xff] %v501
      %593 = vst [vmem:[%s228 + $0x98] sm:$0xff] %v503
      %594 = vst [vmem:[%s228 + $0xa0] sm:$0xff] %v568
      %595 = vst [vmem:[%s228 + $0xa8] sm:$0xff] %v505
      %596 = vst [vmem:[%s228 + $0xb0] sm:$0xff] %v507
      %597 = vst [vmem:[%s228 + $0xb8] sm:$0xff] %v571
      %s598 = smul.u32 8, %s16
      %p599 = scmp.lt.s32.totalorder %s598, 15
      %s600 = scalar_select %p599, %s598, 15
      %s601 = smul.addr %s600, 3
      %s602 = smul.addr %s601, 8
      %s603 = scalar_lea.vmem %s5, %s602
      // Predicated region
      $region41: #{variational_encoder_forward.3} parent=39 // pred_check
        %p604 = pneg %p144
      $region42: #{variational_encoder_forward.3} parent=39 // pred_check_branch
        %606 = sbr.rel (%p604) target = $region44
      $region43: #{variational_encoder_forward.3} parent=39 // pred_region
        %s607 = smul.u32 8, %s16
      $region44: #{variational_encoder_forward.3} parent=39 // pred_fallthru
        _
    $region40: #{variational_encoder_forward.3} parent=5 // pred_fallthru
      _
    %p608 = scmp.le.s32.totalorder 2, %s11
    // Predicated region
    $region45: #{variational_encoder_forward.3} parent=5 // pred_check
      %p609 = pneg %p608
    $region46: #{variational_encoder_forward.3} parent=5 // pred_check_branch
      %611 = sbr.rel (%p609) target = $region48
    $region47: #{variational_encoder_forward.3} parent=5 // pred_region
      %s612 = ssub.s32 %s11, 2
      // Predicated region
      $region49: #{variational_encoder_forward.3} parent=47 // pred_check
        %p613 = pneg %p150
      $region50: #{variational_encoder_forward.3} parent=47 // pred_check_branch
        %615 = sbr.rel (%p613) target = $region52
      $region51: #{variational_encoder_forward.3} parent=47 // pred_region
        %s616 = smul.u32 8, %s17
        %p617 = scmp.lt.s32.totalorder %s616, 15
        %s618 = scalar_select %p617, %s616, 15
        %s619 = smul.addr %s618, 3
        %s620 = smul.addr %s619, 8
        %s621 = scalar_lea.vmem %s5, %s620
      $region52: #{variational_encoder_forward.3} parent=47 // pred_fallthru
        _
    $region48: #{variational_encoder_forward.3} parent=5 // pred_fallthru
      _
  $region6: #{variational_encoder_forward.3} parent=0 // loop_footer
    %s15 = sadd.s32 1, %s11
  $region7: #{variational_encoder_forward.3} parent=0 // loop_footer_branch
    %10 = sbr.rel target = $region3
  $region8: #{variational_encoder_forward.3} parent=0 // loop_exit
    _

// kernel: variational_encoder_forward.4
$region0: #{variational_encoder_forward.4}
  #allocation0 [shape = 'u32[]', space=smem, size = 0x4, offset = 0x4, fixed_abs, tag = 'smem constant byte address 0x4 - core index']
  #allocation1 [shape = 'u32[144,128]{1,0:T(1,128)}', space=vmem, size = 0x12000, scoped, tag = 'internal scratch']
  %s0 = inlined_call_operand.vmem [shape: f32[64,2,384], index: 0, kind: input, shape index: {}]
  %s1 = inlined_call_operand.vmem [shape: f32[128,384], index: 1, kind: input, shape index: {}]
  %s2 = inlined_call_operand.vmem [shape: f32[1,384], index: 2, kind: input, shape index: {}]
  %s3 = inlined_call_operand.vmem [shape: f32[64,2,128], index: 3, kind: output, shape index: {}]
  %s4 = sld [smem:[#allocation0]]
  $region29: #{variational_encoder_forward.4} parent=0
    _
  %s6 = ssub.s32 1, %s4
  %s7 = scalar_select 0, %s6, %s4
  // Predicated region
  $region2: #{variational_encoder_forward.4} parent=0 // pred_check
    _
  $region3: #{variational_encoder_forward.4} parent=0 // pred_check_branch
    %9 = sbr.rel (0) target = $region5
  $region4: #{variational_encoder_forward.4} parent=0 // pred_region
    _
  $region5: #{variational_encoder_forward.4} parent=0 // pred_fallthru
    _
  // Predicated region
  $region6: #{variational_encoder_forward.4} parent=0 // pred_check
    _
  $region7: #{variational_encoder_forward.4} parent=0 // pred_check_branch
    %11 = sbr.rel (0) target = $region9
  $region8: #{variational_encoder_forward.4} parent=0 // pred_region
    _
  $region9: #{variational_encoder_forward.4} parent=0 // pred_fallthru
    _
  // Predicated region
  $region10: #{variational_encoder_forward.4} parent=0 // pred_check
    _
  $region11: #{variational_encoder_forward.4} parent=0 // pred_check_branch
    %13 = sbr.rel (0) target = $region13
  $region12: #{variational_encoder_forward.4} parent=0 // pred_region
    _
  $region13: #{variational_encoder_forward.4} parent=0 // pred_fallthru
    _
  %v14 = vld [vmem:[%s2] sm:$0x7]
  loop: start=0, step=1, limit=64
  $region14: #{variational_encoder_forward.4} parent=0 // loop_pre_header
    _
  $region15: #{variational_encoder_forward.4} parent=0 // loop_header
    %s16 = sphi 0, %s20
    %p17 = scmp.ge.s32.totalorder %s16, 64
    %v21 = vphi 0.0, %v256
  $region16: #{variational_encoder_forward.4} parent=0 // loop_header_branch
    %19 = sbr.rel (%p17) target = $region20
  $region17: #{variational_encoder_forward.4} parent=0 // loop_body
    %s22 = smul.u32 %s16, 3
    %s23 = smul.addr %s22, 2
    %s24 = scalar_lea.vmem %s0, %s23
    %v25 = vld [vmem:[%s24] sm:$0x3f]
    %v26 = vld [vmem:[%s1] sm:$0xff]
    %v27 = vld [vmem:[%s1 + $0x8] sm:$0xff]
    %v28 = vld [vmem:[%s1 + $0x10] sm:$0xff]
    %v29 = vld [vmem:[%s1 + $0x18] sm:$0xff]
    %v30 = vld [vmem:[%s1 + $0x20] sm:$0xff]
    %v31 = vld [vmem:[%s1 + $0x28] sm:$0xff]
    %v32 = vld [vmem:[%s1 + $0x30] sm:$0xff]
    %v33 = vld [vmem:[%s1 + $0x38] sm:$0xff]
    %v34 = vld [vmem:[%s1 + $0x40] sm:$0xff]
    %v35 = vld [vmem:[%s1 + $0x48] sm:$0xff]
    %v36 = vld [vmem:[%s1 + $0x50] sm:$0xff]
    %v37 = vld [vmem:[%s1 + $0x58] sm:$0xff]
    %v38 = vld [vmem:[%s1 + $0x60] sm:$0xff]
    %v39 = vld [vmem:[%s1 + $0x68] sm:$0xff]
    %v40 = vld [vmem:[%s1 + $0x70] sm:$0xff]
    %v41 = vld [vmem:[%s1 + $0x78] sm:$0xff]
    %v42 = vld [vmem:[%s1 + $0x80] sm:$0xff]
    %v43 = vld [vmem:[%s1 + $0x88] sm:$0xff]
    %v44 = vld [vmem:[%s1 + $0x90] sm:$0xff]
    %v45 = vld [vmem:[%s1 + $0x98] sm:$0xff]
    %v46 = vld [vmem:[%s1 + $0xa0] sm:$0xff]
    %v47 = vld [vmem:[%s1 + $0xa8] sm:$0xff]
    %v48 = vld [vmem:[%s1 + $0xb0] sm:$0xff]
    %v49 = vld [vmem:[%s1 + $0xb8] sm:$0xff]
    %v50 = vld [vmem:[%s1 + $0xc0] sm:$0xff]
    %v51 = vld [vmem:[%s1 + $0xc8] sm:$0xff]
    %v52 = vld [vmem:[%s1 + $0xd0] sm:$0xff]
    %v53 = vld [vmem:[%s1 + $0xd8] sm:$0xff]
    %v54 = vld [vmem:[%s1 + $0xe0] sm:$0xff]
    %v55 = vld [vmem:[%s1 + $0xe8] sm:$0xff]
    %v56 = vld [vmem:[%s1 + $0xf0] sm:$0xff]
    %v57 = vld [vmem:[%s1 + $0xf8] sm:$0xff]
    %v58 = vld [vmem:[%s1 + $0x100] sm:$0xff]
    %v59 = vld [vmem:[%s1 + $0x108] sm:$0xff]
    %v60 = vld [vmem:[%s1 + $0x110] sm:$0xff]
    %v61 = vld [vmem:[%s1 + $0x118] sm:$0xff]
    %v62 = vld [vmem:[%s1 + $0x120] sm:$0xff]
    %v63 = vld [vmem:[%s1 + $0x128] sm:$0xff]
    %v64 = vld [vmem:[%s1 + $0x130] sm:$0xff]
    %v65 = vld [vmem:[%s1 + $0x138] sm:$0xff]
    %v66 = vld [vmem:[%s1 + $0x140] sm:$0xff]
    %v67 = vld [vmem:[%s1 + $0x148] sm:$0xff]
    %v68 = vld [vmem:[%s1 + $0x150] sm:$0xff]
    %v69 = vld [vmem:[%s1 + $0x158] sm:$0xff]
    %v70 = vld [vmem:[%s1 + $0x160] sm:$0xff]
    %v71 = vld [vmem:[%s1 + $0x168] sm:$0xff]
    %v72 = vld [vmem:[%s1 + $0x170] sm:$0xff]
    %v73 = vld [vmem:[%s1 + $0x178] sm:$0xff]
    %v75 = vlaneseq
    %v76 = vshrl.u32 %v75, 7
    %v77 = vsub.s32 0, %v76
    %v78 = vrot.slane %v14, %v77
    %v79 = vlaneseq
    %v80 = vshrl.u32 %v79, 7
    %v81 = vsub.s32 1, %v80
    %v82 = vrot.slane %v14, %v81
    %v83 = vlaneseq
    %v84 = vshrl.u32 %v83, 7
    %v85 = vsub.s32 2, %v84
    %v86 = vrot.slane %v14, %v85
    %90 = vmatprep.subr.mxu0 %v72
    %91 = vmatpush1.msra.mxu0 %v71
    %92 = vmatprep.subr.mxu0 %v69
    %93 = vmatpush1.msra.mxu0 %v68
    %94 = vmatprep.subr.mxu0 %v66
    %95 = vmatpush1.msra.mxu0 %v65
    %96 = vmatprep.subr.mxu0 %v63
    %97 = vmatpush1.msra.mxu0 %v62
    %98 = vmatprep.subr.mxu0 %v60
    %99 = vmatpush1.msra.mxu0 %v59
    %100 = vmatprep.subr.mxu0 %v57
    %101 = vmatpush1.msra.mxu0 %v56
    %102 = vmatprep.subr.mxu0 %v54
    %103 = vmatpush1.msra.mxu0 %v53
    %104 = vmatprep.subr.mxu0 %v51
    %105 = vmatpush1.msra.mxu0 %v50
    %106 = vmatprep.subr.mxu0 %v48
    %107 = vmatpush1.msra.mxu0 %v47
    %108 = vmatprep.subr.mxu0 %v45
    %109 = vmatpush1.msra.mxu0 %v44
    %110 = vmatprep.subr.mxu0 %v42
    %111 = vmatpush1.msra.mxu0 %v41
    %112 = vmatprep.subr.mxu0 %v39
    %113 = vmatpush1.msra.mxu0 %v38
    %114 = vmatprep.subr.mxu0 %v36
    %115 = vmatpush1.msra.mxu0 %v35
    %116 = vmatprep.subr.mxu0 %v33
    %117 = vmatpush1.msra.mxu0 %v32
    %118 = vmatprep.subr.mxu0 %v30
    %119 = vmatpush1.msra.mxu0 %v29
    %120 = vmatprep.subr.mxu0 %v27
    %121 = vmatpush1.msra.mxu0 %v26
    %122 = vmatprep.subr.mxu0 0.0
    %123 = vmatpush2.msra.mxu0 0.0
    %124 = vmatprep.subr.mxu0 0.0
    %125 = vmatpush2.msra.mxu0 0.0
    %126 = vmatprep.subr.mxu0 0.0
    %127 = vmatpush2.msra.mxu0 0.0
    %128 = vmatprep.subr.mxu0 0.0
    %129 = vmatpush2.msra.mxu0 0.0
    %130 = vmatprep.subr.mxu0 0.0
    %131 = vmatpush2.msra.mxu0 0.0
    %132 = vmatprep.subr.mxu0 0.0
    %133 = vmatpush2.msra.mxu0 0.0
    %134 = vmatprep.subr.mxu0 0.0
    %135 = vmatpush2.msra.mxu0 0.0
    %136 = vmatprep.subr.mxu0 0.0
    %137 = vmatpush2.msra.mxu0 0.0
    %138 = vmatprep.subr.mxu0 0.0
    %139 = vmatpush2.msra.mxu0 0.0
    %140 = vmatprep.subr.mxu0 0.0
    %141 = vmatpush2.msra.mxu0 0.0
    %142 = vmatprep.subr.mxu0 0.0
    %143 = vmatpush2.msra.mxu0 0.0
    %144 = vmatprep.subr.mxu0 0.0
    %145 = vmatpush2.msra.mxu0 0.0
    %146 = vmatprep.subr.mxu0 0.0
    %147 = vmatpush2.msra.mxu0 0.0
    %148 = vmatprep.subr.mxu0 0.0
    %149 = vmatpush2.msra.mxu0 0.0
    %150 = vmatprep.subr.mxu0 0.0
    %151 = vmatpush2.msra.mxu0 0.0
    %152 = vmatprep.subr.mxu0 0.0
    %153 = vmatpush2.msra.mxu0 0.0
    %154 = vmatprep.mubr.f32.mxu0 0.0
    %155 = vmatmul.mubr.f32.gmra.mxu0 %v21
    %v156 = vpop.f32.mrf.mxu0
    %v157 = vadd.f32 %v78, %v156
    %v158 = vpop.f32.mrf.mxu0
    %v159 = vadd.f32 %v82, %v158
    %160 = vdwg.mxu0
    %161 = vmatprep.subr.mxu0 0.0
    %162 = vmatpush1.msra.mxu0 %v73
    %163 = vmatprep.subr.mxu0 0.0
    %164 = vmatpush1.msra.mxu0 %v70
    %165 = vmatprep.subr.mxu0 0.0
    %166 = vmatpush1.msra.mxu0 %v67
    %167 = vmatprep.subr.mxu0 0.0
    %168 = vmatpush1.msra.mxu0 %v64
    %169 = vmatprep.subr.mxu0 0.0
    %170 = vmatpush1.msra.mxu0 %v61
    %171 = vmatprep.subr.mxu0 0.0
    %172 = vmatpush1.msra.mxu0 %v58
    %173 = vmatprep.subr.mxu0 0.0
    %174 = vmatpush1.msra.mxu0 %v55
    %175 = vmatprep.subr.mxu0 0.0
    %176 = vmatpush1.msra.mxu0 %v52
    %177 = vmatprep.subr.mxu0 0.0
    %178 = vmatpush1.msra.mxu0 %v49
    %179 = vmatprep.subr.mxu0 0.0
    %180 = vmatpush1.msra.mxu0 %v46
    %181 = vmatprep.subr.mxu0 0.0
    %182 = vmatpush1.msra.mxu0 %v43
    %183 = vmatprep.subr.mxu0 0.0
    %184 = vmatpush1.msra.mxu0 %v40
    %185 = vmatprep.subr.mxu0 0.0
    %186 = vmatpush1.msra.mxu0 %v37
    %187 = vmatprep.subr.mxu0 0.0
    %188 = vmatpush1.msra.mxu0 %v34
    %189 = vmatprep.subr.mxu0 0.0
    %190 = vmatpush1.msra.mxu0 %v31
    %191 = vmatprep.subr.mxu0 0.0
    %192 = vmatpush1.msra.mxu0 %v28
    %193 = vmatprep.subr.mxu0 0.0
    %194 = vmatpush2.msra.mxu0 0.0
    %195 = vmatprep.subr.mxu0 0.0
    %196 = vmatpush2.msra.mxu0 0.0
    %197 = vmatprep.subr.mxu0 0.0
    %198 = vmatpush2.msra.mxu0 0.0
    %199 = vmatprep.subr.mxu0 0.0
    %200 = vmatpush2.msra.mxu0 0.0
    %201 = vmatprep.subr.mxu0 0.0
    %202 = vmatpush2.msra.mxu0 0.0
    %203 = vmatprep.subr.mxu0 0.0
    %204 = vmatpush2.msra.mxu0 0.0
    %205 = vmatprep.subr.mxu0 0.0
    %206 = vmatpush2.msra.mxu0 0.0
    %207 = vmatprep.subr.mxu0 0.0
    %208 = vmatpush2.msra.mxu0 0.0
    %209 = vmatprep.subr.mxu0 0.0
    %210 = vmatpush2.msra.mxu0 0.0
    %211 = vmatprep.subr.mxu0 0.0
    %212 = vmatpush2.msra.mxu0 0.0
    %213 = vmatprep.subr.mxu0 0.0
    %214 = vmatpush2.msra.mxu0 0.0
    %215 = vmatprep.subr.mxu0 0.0
    %216 = vmatpush2.msra.mxu0 0.0
    %217 = vmatprep.subr.mxu0 0.0
    %218 = vmatpush2.msra.mxu0 0.0
    %219 = vmatprep.subr.mxu0 0.0
    %220 = vmatpush2.msra.mxu0 0.0
    %221 = vmatprep.subr.mxu0 0.0
    %222 = vmatpush2.msra.mxu0 0.0
    %223 = vmatprep.subr.mxu0 0.0
    %224 = vmatpush2.msra.mxu0 0.0
    %225 = vmatprep.mubr.f32.mxu0 0.0
    %226 = vmatmul.mubr.f32.gmra.mxu0 %v21
    %v227 = vpop.f32.mrf.mxu0
    %v228 = vadd.f32 %v86, %v227
    %v229 = vpop.f32.mrf.mxu0
    %230 = vdwg.mxu0
    %v231 = vadd.f32 %v25, %v157
    %v232 = vxor.u32 %v231, 2147483648
    %v233 = vmul.f32 %v232, 1.442695
    %v234 = vpow.pop %v233
    %v235 = vadd.f32 %v234, 1.0
    %v236 = vrcp.pop %v235
    %v237 = vmul.f32 1.0, %v236
    %v239 = vrot.slane %v25, 2
    %v241 = vadd.f32 %v239, %v159
    %v242 = vxor.u32 %v241, 2147483648
    %v243 = vmul.f32 %v242, 1.442695
    %v244 = vpow.pop %v243
    %v245 = vadd.f32 %v244, 1.0
    %v246 = vrcp.pop %v245
    %v247 = vmul.f32 1.0, %v246
    %v248 = vmul.f32 %v237, %v228
    %v249 = vrot.slane %v25, 4
    %v251 = vadd.f32 %v249, %v248
    %v252 = vtanh.pop %v251
    %v253 = vsub.f32 1.0, %v247
    %v254 = vmul.f32 %v253, %v252
    %v255 = vmul.f32 %v247, %v21
    %v256 = vadd.f32 %v254, %v255
    %s257 = smul.u32 %s16, 2
    %s258 = scalar_lea.vmem %s3, %s257
    %259 = vst [vmem:[%s258] sm:$0x3] %v256
  $region18: #{variational_encoder_forward.4} parent=0 // loop_footer
    %s20 = sadd.s32 1, %s16
  $region19: #{variational_encoder_forward.4} parent=0 // loop_footer_branch
    %15 = sbr.rel target = $region15
  $region20: #{variational_encoder_forward.4} parent=0 // loop_exit
    _
  // Predicated region
  $region21: #{variational_encoder_forward.4} parent=0 // pred_check
    _
  $region22: #{variational_encoder_forward.4} parent=0 // pred_check_branch
    %261 = sbr.rel (0) target = $region24
  $region23: #{variational_encoder_forward.4} parent=0 // pred_region
    _
  $region24: #{variational_encoder_forward.4} parent=0 // pred_fallthru
    _
  // Predicated region
  $region25: #{variational_encoder_forward.4} parent=0 // pred_check
    _
  $region26: #{variational_encoder_forward.4} parent=0 // pred_check_branch
    %263 = sbr.rel (0) target = $region28
  $region27: #{variational_encoder_forward.4} parent=0 // pred_region
    _
  $region28: #{variational_encoder_forward.4} parent=0 // pred_fallthru
    _

// kernel: variational_encoder_forward.5
$region0: #{variational_encoder_forward.5}
  #allocation0 [shape = 'u32[]', space=smem, size = 0x4, offset = 0x4, fixed_abs, tag = 'smem constant byte address 0x4 - core index']
  #allocation1 [shape = 'u32[144,128]{1,0:T(1,128)}', space=vmem, size = 0x12000, scoped, tag = 'internal scratch']
  %s0 = inlined_call_operand.vmem [shape: f32[128,128], index: 0, kind: input, shape index: {}]
  %s1 = inlined_call_operand.vmem [shape: f32[128,64], index: 1, kind: input, shape index: {}]
  %s2 = inlined_call_operand.vmem [shape: f32[64,32], index: 2, kind: input, shape index: {}]
  %s3 = inlined_call_operand.vmem [shape: f32[32,32], index: 3, kind: input, shape index: {}]
  %s4 = inlined_call_operand.vmem [shape: f32[8,128], index: 4, kind: input, shape index: {}]
  %s5 = inlined_call_operand.vmem [shape: f32[128,32], index: 5, kind: output, shape index: {}]
  %s6 = sld [smem:[#allocation0]]
  $region53: #{variational_encoder_forward.5} parent=0
    _
  %s8 = ssub.s32 1, %s6
  %s9 = scalar_select 0, %s8, %s6
  loop: start=0, step=1, limit=4
  $region2: #{variational_encoder_forward.5} parent=0 // loop_pre_header
    _
  $region3: #{variational_encoder_forward.5} parent=0 // loop_header
    %s11 = sphi 0, %s15
    %p12 = scmp.ge.s32.totalorder %s11, 4
    %s21 = sphi 0, %s23
    %s24 = sphi 0, %s21
    %s25 = sphi 0, %s24
    %s41 = sphi 0, %s25
    %s45 = sphi 0, %s45
    %s47 = sphi 0, %s45
    %s48 = sphi 0, %s47
    %s62 = sphi 0, %s48
    %s66 = sphi 0, %s66
    %s68 = sphi 0, %s66
    %s69 = sphi 0, %s68
    %s83 = sphi 0, %s69
    %s87 = sphi 0, %s87
    %s89 = sphi 0, %s87
    %s90 = sphi 0, %s89
    %s104 = sphi 0, %s90
    %s108 = sphi 0, %s108
    %s110 = sphi 0, %s108
    %s111 = sphi 0, %s110
    %s125 = sphi 0, %s111
    %s131 = sphi 0, %s133
    %s134 = sphi 0, %s131
    %s135 = sphi 0, %s134
    %s151 = sphi 0, %s135
  $region4: #{variational_encoder_forward.5} parent=0 // loop_header_branch
    %14 = sbr.rel (%p12) target = $region8
  $region5: #{variational_encoder_forward.5} parent=0 // loop_body
    %s16 = ssub.s32 %s11, 1
    %s17 = ssub.s32 %s11, 2
    %s18 = sadd.s32 %s11, 1
    %s19 = ssub.s32 %s11, %s18
    %p20 = scmp.eq.s32.totalorder %s19, 0
    %s22 = sadd.s32 %s21, 1
    %s23 = scalar_select %p20, %s21, %s22
    %p26 = pneg %p20
    %p27 = scmp.eq.s32.totalorder %s11, 1
    %p28 = por %p26, %p27
    %p29 = scmp.ne.s32.totalorder %s21, %s24
    %p30 = scmp.eq.s32.totalorder %s11, 0
    %p31 = por %p29, %p30
    %p32 = scmp.ne.s32.totalorder %s21, %s24
    %p33 = scmp.eq.s32.totalorder %s16, 1
    %p34 = por %p32, %p33
    %p35 = scmp.ne.s32.totalorder %s24, %s25
    %p36 = scmp.eq.s32.totalorder %s16, 0
    %p37 = por %p35, %p36
    %p38 = scmp.ne.s32.totalorder %s24, %s25
    %p39 = scmp.eq.s32.totalorder %s17, 1
    %p40 = por %p38, %p39
    %p42 = scmp.ne.s32.totalorder %s25, %s41
    %p43 = scmp.eq.s32.totalorder %s17, 0
    %p44 = por %p42, %p43
    %s46 = sadd.s32 %s45, 1
    %p49 = scmp.eq.s32.totalorder %s11, 1
    %p50 = scmp.ne.s32.totalorder %s45, %s47
    %p51 = scmp.eq.s32.totalorder %s11, 0
    %p52 = por %p50, %p51
    %p53 = scmp.ne.s32.totalorder %s45, %s47
    %p54 = scmp.eq.s32.totalorder %s16, 1
    %p55 = por %p53, %p54
    %p56 = scmp.ne.s32.totalorder %s47, %s48
    %p57 = scmp.eq.s32.totalorder %s16, 0
    %p58 = por %p56, %p57
    %p59 = scmp.ne.s32.totalorder %s47, %s48
    %p60 = scmp.eq.s32.totalorder %s17, 1
    %p61 = por %p59, %p60
    %p63 = scmp.ne.s32.totalorder %s48, %s62
    %p64 = scmp.eq.s32.totalorder %s17, 0
    %p65 = por %p63, %p64
    %s67 = sadd.s32 %s66, 1
    %p70 = scmp.eq.s32.totalorder %s11, 1
    %p71 = scmp.ne.s32.totalorder %s66, %s68
    %p72 = scmp.eq.s32.totalorder %s11, 0
    %p73 = por %p71, %p72
    %p74 = scmp.ne.s32.totalorder %s66, %s68
    %p75 = scmp.eq.s32.totalorder %s16, 1
    %p76 = por %p74, %p75
    %p77 = scmp.ne.s32.totalorder %s68, %s69
    %p78 = scmp.eq.s32.totalorder %s16, 0
    %p79 = por %p77, %p78
    %p80 = scmp.ne.s32.totalorder %s68, %s69
    %p81 = scmp.eq.s32.totalorder %s17, 1
    %p82 = por %p80, %p81
    %p84 = scmp.ne.s32.totalorder %s69, %s83
    %p85 = scmp.eq.s32.totalorder %s17, 0
    %p86 = por %p84, %p85
    %s88 = sadd.s32 %s87, 1
    %p91 = scmp.eq.s32.totalorder %s11, 1
    %p92 = scmp.ne.s32.totalorder %s87, %s89
    %p93 = scmp.eq.s32.totalorder %s11, 0
    %p94 = por %p92, %p93
    %p95 = scmp.ne.s32.totalorder %s87, %s89
    %p96 = scmp.eq.s32.totalorder %s16, 1
    %p97 = por %p95, %p96
    %p98 = scmp.ne.s32.totalorder %s89, %s90
    %p99 = scmp.eq.s32.totalorder %s16, 0
    %p100 = por %p98, %p99
    %p101 = scmp.ne.s32.totalorder %s89, %s90
    %p102 = scmp.eq.s32.totalorder %s17, 1
    %p103 = por %p101, %p102
    %p105 = scmp.ne.s32.totalorder %s90, %s104
    %p106 = scmp.eq.s32.totalorder %s17, 0
    %p107 = por %p105, %p106
    %s109 = sadd.s32 %s108, 1
    %p112 = scmp.eq.s32.totalorder %s11, 1
    %p113 = scmp.ne.s32.totalorder %s108, %s110
    %p114 = scmp.eq.s32.totalorder %s11, 0
    %p115 = por %p113, %p114
    %p116 = scmp.ne.s32.totalorder %s108, %s110
    %p117 = scmp.eq.s32.totalorder %s16, 1
    %p118 = por %p116, %p117
    %p119 = scmp.ne.s32.totalorder %s110, %s111
    %p120 = scmp.eq.s32.totalorder %s16, 0
    %p121 = por %p119, %p120
    %p122 = scmp.ne.s32.totalorder %s110, %s111
    %p123 = scmp.eq.s32.totalorder %s17, 1
    %p124 = por %p122, %p123
    %p126 = scmp.ne.s32.totalorder %s111, %s125
    %p127 = scmp.eq.s32.totalorder %s17, 0
    %p128 = por %p126, %p127
    %s129 = ssub.s32 %s11, %s18
    %p130 = scmp.eq.s32.totalorder %s129, 0
    %s132 = sadd.s32 %s131, 1
    %s133 = scalar_select %p130, %s131, %s132
    %p136 = pneg %p130
    %p137 = scmp.eq.s32.totalorder %s11, 1
    %p138 = por %p136, %p137
    %p139 = scmp.ne.s32.totalorder %s131, %s134
    %p140 = scmp.eq.s32.totalorder %s11, 0
    %p141 = por %p139, %p140
    %p142 = scmp.ne.s32.totalorder %s131, %s134
    %p143 = scmp.eq.s32.totalorder %s16, 1
    %p144 = por %p142, %p143
    %p145 = scmp.ne.s32.totalorder %s134, %s135
    %p146 = scmp.eq.s32.totalorder %s16, 0
    %p147 = por %p145, %p146
    %p148 = scmp.ne.s32.totalorder %s134, %s135
    %p149 = scmp.eq.s32.totalorder %s17, 1
    %p150 = por %p148, %p149
    %p152 = scmp.ne.s32.totalorder %s135, %s151
    %p153 = scmp.eq.s32.totalorder %s17, 0
    %p154 = por %p152, %p153
    %p155 = scmp.le.s32.totalorder 1, %s11
    %p156 = scmp.lt.s32.totalorder %s11, 3
    %p157 = pnand %p155, %p156
    %p158 = pneg %p157
    // Predicated region
    $region9: #{variational_encoder_forward.5} parent=5 // pred_check
      _
    $region10: #{variational_encoder_forward.5} parent=5 // pred_check_branch
      %160 = sbr.rel (%p157) target = $region12
    $region11: #{variational_encoder_forward.5} parent=5 // pred_region
      %s161 = ssub.s32 %s11, 1
      // Predicated region
      $region13: #{variational_encoder_forward.5} parent=11 // pred_check
        %p162 = pneg %p58
      $region14: #{variational_encoder_forward.5} parent=11 // pred_check_branch
        %164 = sbr.rel (%p162) target = $region16
      $region15: #{variational_encoder_forward.5} parent=11 // pred_region
        _
      $region16: #{variational_encoder_forward.5} parent=11 // pred_fallthru
        _
      // Predicated region
      $region17: #{variational_encoder_forward.5} parent=11 // pred_check
        %p165 = pneg %p79
      $region18: #{variational_encoder_forward.5} parent=11 // pred_check_branch
        %167 = sbr.rel (%p165) target = $region20
      $region19: #{variational_encoder_forward.5} parent=11 // pred_region
        _
      $region20: #{variational_encoder_forward.5} parent=11 // pred_fallthru
        _
      // Predicated region
      $region21: #{variational_encoder_forward.5} parent=11 // pred_check
        %p168 = pneg %p100
      $region22: #{variational_encoder_forward.5} parent=11 // pred_check_branch
        %170 = sbr.rel (%p168) target = $region24
      $region23: #{variational_encoder_forward.5} parent=11 // pred_region
        _
      $region24: #{variational_encoder_forward.5} parent=11 // pred_fallthru
        _
      // Predicated region
      $region25: #{variational_encoder_forward.5} parent=11 // pred_check
        %p171 = pneg %p121
      $region26: #{variational_encoder_forward.5} parent=11 // pred_check_branch
        %173 = sbr.rel (%p171) target = $region28
      $region27: #{variational_encoder_forward.5} parent=11 // pred_region
        _
      $region28: #{variational_encoder_forward.5} parent=11 // pred_fallthru
        _
    $region12: #{variational_encoder_forward.5} parent=5 // pred_fallthru
      _
    %p174 = scmp.lt.s32.totalorder %s11, 2
    // Predicated region
    $region29: #{variational_encoder_forward.5} parent=5 // pred_check
      %p175 = pneg %p174
    $region30: #{variational_encoder_forward.5} parent=5 // pred_check_branch
      %177 = sbr.rel (%p175) target = $region32
    $region31: #{variational_encoder_forward.5} parent=5 // pred_region
      // Predicated region
      $region33: #{variational_encoder_forward.5} parent=31 // pred_check
        %p178 = pneg %p31
      $region34: #{variational_encoder_forward.5} parent=31 // pred_check_branch
        %180 = sbr.rel (%p178) target = $region36
      $region35: #{variational_encoder_forward.5} parent=31 // pred_region
        %s181 = smul.u32 8, %s11
        %p182 = scmp.lt.s32.totalorder %s181, 15
        %s183 = scalar_select %p182, %s181, 15
        %s184 = smul.addr %s183, 8
        %s185 = scalar_lea.vmem %s0, %s184
        %s186 = smul.u32 8, %s11
      $region36: #{variational_encoder_forward.5} parent=31 // pred_fallthru
        _
    $region32: #{variational_encoder_forward.5} parent=5 // pred_fallthru
      _
    %p187 = scmp.le.s32.totalorder 1, %s11
    %p188 = scmp.lt.s32.totalorder %s11, 3
    %p189 = pnand %p187, %p188
    %p190 = pneg %p189
    // Predicated region
    $region37: #{variational_encoder_forward.5} parent=5 // pred_check
      _
    $region38: #{variational_encoder_forward.5} parent=5 // pred_check_branch
      %192 = sbr.rel (%p189) target = $region40
    $region39: #{variational_encoder_forward.5} parent=5 // pred_region
      %s193 = ssub.s32 %s11, 1
      %s194 = smul.u32 8, %s16
      %p195 = scmp.lt.s32.totalorder %s194, 15
      %s196 = scalar_select %p195, %s194, 15
      %s197 = smul.addr %s196, 8
      %s198 = scalar_lea.vmem %s0, %s197
      %p199 = pneg %p37
      %p200 = pneg %p34
      %p201 = pneg %p58
      %p202 = pneg %p55
      %p203 = pneg %p79
      %p204 = pneg %p76
      %p205 = pneg %p100
      %p206 = pneg %p97
      %p207 = pneg %p121
      %p208 = pneg %p118
      %p209 = pneg %p147
      %p210 = pneg %p144
      %s211 = smul.u32 8, %s16
      %p212 = scmp.lt.s32.totalorder %s211, 15
      %s213 = scalar_select %p212, %s211, 15
      %s214 = smul.addr %s213, 8
      %s215 = scalar_lea.vmem %s5, %s214
      %s216 = smul.u32 8, %s16
      %p217 = scmp.lt.s32.totalorder %s216, 15
      %s218 = scalar_select %p217, %s216, 15
      %s219 = smul.addr %s218, 8
      %s220 = scalar_lea.vmem %s0, %s219
      %s221 = smul.u32 8, %s16
      %s222 = smul.u32 8, %s16
      %p223 = scmp.lt.s32.totalorder %s222, 15
      %s224 = scalar_select %p223, %s222, 15
      %s225 = smul.addr %s224, 8
      %s226 = scalar_lea.vmem %s5, %s225
      %s227 = smul.u32 8, %s16
      %v229 = vld [vmem:[%s4] sm:$0xff]
      %v230 = vld [vmem:[%s220] sm:$0xff]
      %v231 = vld [vmem:[%s220 + $0x8] sm:$0xff]
      %v232 = vld [vmem:[%s220 + $0x10] sm:$0xff]
      %v233 = vld [vmem:[%s220 + $0x18] sm:$0xff]
      %v234 = vld [vmem:[%s220 + $0x20] sm:$0xff]
      %v235 = vld [vmem:[%s220 + $0x28] sm:$0xff]
      %v236 = vld [vmem:[%s220 + $0x30] sm:$0xff]
      %v237 = vld [vmem:[%s220 + $0x38] sm:$0xff]
      %v238 = vld [vmem:[%s1] sm:$0xff]
      %v239 = vld [vmem:[%s1 + $0x8] sm:$0xff]
      %v240 = vld [vmem:[%s1 + $0x10] sm:$0xff]
      %v241 = vld [vmem:[%s1 + $0x18] sm:$0xff]
      %v242 = vld [vmem:[%s1 + $0x20] sm:$0xff]
      %v243 = vld [vmem:[%s1 + $0x28] sm:$0xff]
      %v244 = vld [vmem:[%s1 + $0x30] sm:$0xff]
      %v245 = vld [vmem:[%s1 + $0x38] sm:$0xff]
      %v246 = vld [vmem:[%s1 + $0x40] sm:$0xff]
      %v247 = vld [vmem:[%s1 + $0x48] sm:$0xff]
      %v248 = vld [vmem:[%s1 + $0x50] sm:$0xff]
      %v249 = vld [vmem:[%s1 + $0x58] sm:$0xff]
      %v250 = vld [vmem:[%s1 + $0x60] sm:$0xff]
      %v251 = vld [vmem:[%s1 + $0x68] sm:$0xff]
      %v252 = vld [vmem:[%s1 + $0x70] sm:$0xff]
      %v253 = vld [vmem:[%s1 + $0x78] sm:$0xff]
      %v254 = vpack.c.bf16 %v231, %v230
      %v255 = vpack.c.bf16 %v233, %v232
      %v256 = vpack.c.bf16 %v235, %v234
      %v257 = vpack.c.bf16 %v237, %v236
      %v258 = vpack.c.bf16 %v239, %v238
      %v259 = vpack.c.bf16 %v241, %v240
      %v260 = vpack.c.bf16 %v243, %v242
      %v261 = vpack.c.bf16 %v245, %v244
      %v262 = vpack.c.bf16 %v247, %v246
      %v263 = vpack.c.bf16 %v249, %v248
      %v264 = vpack.c.bf16 %v251, %v250
      %v265 = vpack.c.bf16 %v253, %v252
      %v266 = vlaneseq
      %v267 = vshrl.u32 %v266, 7
      %v268 = vsub.s32 0, %v267
      %v269 = vrot.slane %v229, %v268
      %270 = vmatprep.subr.bf16.mxu0 0
      %271 = vmatpush1.bf16.msra.mxu0 %v265
      %272 = vmatprep.subr.bf16.mxu0 0
      %273 = vmatpush1.bf16.msra.mxu0 %v264
      %274 = vmatprep.subr.bf16.mxu0 0
      %275 = vmatpush1.bf16.msra.mxu0 %v263
      %276 = vmatprep.subr.bf16.mxu0 0
      %277 = vmatpush1.bf16.msra.mxu0 %v262
      %278 = vmatprep.subr.bf16.mxu0 0
      %279 = vmatpush1.bf16.msra.mxu0 %v261
      %280 = vmatprep.subr.bf16.mxu0 0
      %281 = vmatpush1.bf16.msra.mxu0 %v260
      %282 = vmatprep.subr.bf16.mxu0 0
      %283 = vmatpush1.bf16.msra.mxu0 %v259
      %284 = vmatprep.subr.bf16.mxu0 0
      %285 = vmatpush1.bf16.msra.mxu0 %v258
      %286 = vmatprep.subr.bf16.mxu0 0
      %287 = vmatpush2.bf16.msra.mxu0 0
      %288 = vmatprep.subr.bf16.mxu0 0
      %289 = vmatpush2.bf16.msra.mxu0 0
      %290 = vmatprep.subr.bf16.mxu0 0
      %291 = vmatpush2.bf16.msra.mxu0 0
      %292 = vmatprep.subr.bf16.mxu0 0
      %293 = vmatpush2.bf16.msra.mxu0 0
      %294 = vmatprep.subr.bf16.mxu0 0
      %295 = vmatpush2.bf16.msra.mxu0 0
      %296 = vmatprep.subr.bf16.mxu0 0
      %297 = vmatpush2.bf16.msra.mxu0 0
      %298 = vmatprep.subr.bf16.mxu0 0
      %299 = vmatpush2.bf16.msra.mxu0 0
      %300 = vmatprep.subr.bf16.mxu0 0
      %301 = vmatpush2.bf16.msra.mxu0 0
      %302 = vmatprep.mubr.bf16.mxu0 0
      %303 = vmatmul.mubr.bf16.gmra.mxu0 %v254
      %v304 = vpop.f32.mrf.mxu0
      %v305 = vadd.f32 %v269, %v304
      %v306 = vpop.f32.mrf.mxu0
      %v307 = vpop.f32.mrf.mxu0
      %v308 = vadd.f32 %v269, %v307
      %v309 = vpop.f32.mrf.mxu0
      %310 = vmatprep.mubr.bf16.mxu0 0
      %311 = vmatmul.mubr.bf16.gmra.mxu0 %v255
      %v312 = vpop.f32.mrf.mxu0
      %v313 = vadd.f32 %v269, %v312
      %v314 = vpop.f32.mrf.mxu0
      %v315 = vpop.f32.mrf.mxu0
      %v316 = vadd.f32 %v269, %v315
      %v317 = vpop.f32.mrf.mxu0
      %318 = vmatprep.mubr.bf16.mxu0 0
      %319 = vmatmul.mubr.bf16.gmra.mxu0 %v256
      %v320 = vpop.f32.mrf.mxu0
      %v321 = vadd.f32 %v269, %v320
      %v322 = vpop.f32.mrf.mxu0
      %v323 = vpop.f32.mrf.mxu0
      %v324 = vadd.f32 %v269, %v323
      %v325 = vpop.f32.mrf.mxu0
      %326 = vmatprep.mubr.bf16.mxu0 0
      %327 = vmatmul.mubr.bf16.gmra.mxu0 %v257
      %v328 = vpop.f32.mrf.mxu0
      %v329 = vadd.f32 %v269, %v328
      %v330 = vpop.f32.mrf.mxu0
      %v331 = vpop.f32.mrf.mxu0
      %v332 = vadd.f32 %v269, %v331
      %v333 = vpop.f32.mrf.mxu0
      %334 = vdwg.mxu0
      %vm335 = vcmask 523264
      %v336 = vsel %vm335, %v305, 0.0
      %337 = vadd.xlane.f32.xlu0 %v336
      %v338 = vpop.xlane.xlu0 %337
      %v339 = vsel %vm335, %v308, 0.0
      %340 = vadd.xlane.f32.xlu0 %v339
      %v341 = vpop.xlane.xlu0 %340
      %v342 = vsel %vm335, %v313, 0.0
      %343 = vadd.xlane.f32.xlu0 %v342
      %v344 = vpop.xlane.xlu0 %343
      %v345 = vsel %vm335, %v316, 0.0
      %346 = vadd.xlane.f32.xlu0 %v345
      %v347 = vpop.xlane.xlu0 %346
      %v348 = vsel %vm335, %v321, 0.0
      %349 = vadd.xlane.f32.xlu0 %v348
      %v350 = vpop.xlane.xlu0 %349
      %v351 = vsel %vm335, %v324, 0.0
      %352 = vadd.xlane.f32.xlu0 %v351
      %v353 = vpop.xlane.xlu0 %352
      %v354 = vsel %vm335, %v329, 0.0
      %355 = vadd.xlane.f32.xlu0 %v354
      %v356 = vpop.xlane.xlu0 %355
      %v357 = vsel %vm335, %v332, 0.0
      %358 = vadd.xlane.f32.xlu0 %v357
      %v359 = vpop.xlane.xlu0 %358
      %v360 = vrcp.pop 64.0
      %v361 = vmul.f32 %v338, %v360
      %v362 = vmul.f32 %v341, %v360
      %v363 = vmul.f32 %v344, %v360
      %v364 = vmul.f32 %v347, %v360
      %v365 = vmul.f32 %v350, %v360
      %v366 = vmul.f32 %v353, %v360
      %v367 = vmul.f32 %v356, %v360
      %v368 = vmul.f32 %v359, %v360
      %v369 = vsub.f32 %v305, %v361
      %v370 = vsub.f32 %v308, %v362
      %v371 = vsub.f32 %v313, %v363
      %v372 = vsub.f32 %v316, %v364
      %v373 = vsub.f32 %v321, %v365
      %v374 = vsub.f32 %v324, %v366
      %v375 = vsub.f32 %v329, %v367
      %v376 = vsub.f32 %v332, %v368
      %v377 = vmul.f32 %v369, %v369
      %v378 = vmul.f32 %v370, %v370
      %v379 = vmul.f32 %v371, %v371
      %v380 = vmul.f32 %v372, %v372
      %v381 = vmul.f32 %v373, %v373
      %v382 = vmul.f32 %v374, %v374
      %v383 = vmul.f32 %v375, %v375
      %v384 = vmul.f32 %v376, %v376
      %v385 = vsel %vm335, %v377, 0.0
      %386 = vadd.xlane.f32.xlu0 %v385
      %v387 = vpop.xlane.xlu0 %386
      %v388 = vsel %vm335, %v378, 0.0
      %389 = vadd.xlane.f32.xlu0 %v388
      %v390 = vpop.xlane.xlu0 %389
      %v391 = vsel %vm335, %v379, 0.0
      %392 = vadd.xlane.f32.xlu0 %v391
      %v393 = vpop.xlane.xlu0 %392
      %v394 = vsel %vm335, %v380, 0.0
      %395 = vadd.xlane.f32.xlu0 %v394
      %v396 = vpop.xlane.xlu0 %395
      %v397 = vsel %vm335, %v381, 0.0
      %398 = vadd.xlane.f32.xlu0 %v397
      %v399 = vpop.xlane.xlu0 %398
      %v400 = vsel %vm335, %v382, 0.0
      %401 = vadd.xlane.f32.xlu0 %v400
      %v402 = vpop.xlane.xlu0 %401
      %v403 = vsel %vm335, %v383, 0.0
      %404 = vadd.xlane.f32.xlu0 %v403
      %v405 = vpop.xlane.xlu0 %404
      %v406 = vsel %vm335, %v384, 0.0
      %407 = vadd.xlane.f32.xlu0 %v406
      %v408 = vpop.xlane.xlu0 %407
      %v409 = vmul.f32 %v387, %v360
      %v410 = vmul.f32 %v390, %v360
      %v411 = vmul.f32 %v393, %v360
      %v412 = vmul.f32 %v396, %v360
      %v413 = vmul.f32 %v399, %v360
      %v414 = vmul.f32 %v402, %v360
      %v415 = vmul.f32 %v405, %v360
      %v416 = vmul.f32 %v408, %v360
      %v417 = vadd.f32 %v409, 1e-05
      %v418 = vadd.f32 %v410, 1e-05
      %v419 = vadd.f32 %v411, 1e-05
      %v420 = vadd.f32 %v412, 1e-05
      %v421 = vadd.f32 %v413, 1e-05
      %v422 = vadd.f32 %v414, 1e-05
      %v423 = vadd.f32 %v415, 1e-05
      %v424 = vadd.f32 %v416, 1e-05
      %v425 = vrsqrt.pop %v417
      %v426 = vrsqrt.pop %v418
      %v427 = vrsqrt.pop %v419
      %v428 = vrsqrt.pop %v420
      %v429 = vrsqrt.pop %v421
      %v430 = vrsqrt.pop %v422
      %v431 = vrsqrt.pop %v423
      %v432 = vrsqrt.pop %v424
      %v433 = vmul.f32 %v369, %v425
      %v434 = vmul.f32 %v370, %v426
      %v435 = vmul.f32 %v371, %v427
      %v436 = vmul.f32 %v372, %v428
      %v437 = vmul.f32 %v373, %v429
      %v438 = vmul.f32 %v374, %v430
      %v439 = vmul.f32 %v375, %v431
      %v440 = vmul.f32 %v376, %v432
      %v441 = vlaneseq
      %v442 = vshrl.u32 %v441, 7
      %v443 = vsub.s32 1, %v442
      %v444 = vrot.slane %v229, %v443
      %v445 = vmul.f32 %v433, %v444
      %v446 = vmul.f32 %v434, %v444
      %v447 = vmul.f32 %v435, %v444
      %v448 = vmul.f32 %v436, %v444
      %v449 = vmul.f32 %v437, %v444
      %v450 = vmul.f32 %v438, %v444
      %v451 = vmul.f32 %v439, %v444
      %v452 = vmul.f32 %v440, %v444
      %v453 = vlaneseq
      %v454 = vshrl.u32 %v453, 7
      %v455 = vsub.s32 2, %v454
      %v456 = vrot.slane %v229, %v455
      %v457 = vadd.f32 %v445, %v456
      %v458 = vadd.f32 %v446, %v456
      %v459 = vadd.f32 %v447, %v456
      %v460 = vadd.f32 %v448, %v456
      %v461 = vadd.f32 %v449, %v456
      %v462 = vadd.f32 %v450, %v456
      %v463 = vadd.f32 %v451, %v456
      %v464 = vadd.f32 %v452, %v456
      %vm465 = vcmp.ge.f32.partialorder %v457, 0.0
      %vm466 = vcmp.ge.f32.partialorder %v458, 0.0
      %vm467 = vcmp.ge.f32.partialorder %v459, 0.0
      %vm468 = vcmp.ge.f32.partialorder %v460, 0.0
      %vm469 = vcmp.ge.f32.partialorder %v461, 0.0
      %vm470 = vcmp.ge.f32.partialorder %v462, 0.0
      %vm471 = vcmp.ge.f32.partialorder %v463, 0.0
      %vm472 = vcmp.ge.f32.partialorder %v464, 0.0
      %v473 = vmul.f32 %v457, 0.01
      %v474 = vmul.f32 %v458, 0.01
      %v475 = vmul.f32 %v459, 0.01
      %v476 = vmul.f32 %v460, 0.01
      %v477 = vmul.f32 %v461, 0.01
      %v478 = vmul.f32 %v462, 0.01
      %v479 = vmul.f32 %v463, 0.01
      %v480 = vmul.f32 %v464, 0.01
      %v481 = vsel %vm465, %v457, %v473
      %v482 = vsel %vm466, %v458, %v474
      %v483 = vsel %vm467, %v459, %v475
      %v484 = vsel %vm468, %v460, %v476
      %v485 = vsel %vm469, %v461, %v477
      %v486 = vsel %vm470, %v462, %v478
      %v487 = vsel %vm471, %v463, %v479
      %v488 = vsel %vm472, %v464, %v480
      %v489 = vld [vmem:[%s2] sm:$0xff]
      %v490 = vld [vmem:[%s2 + $0x8] sm:$0xff]
      %v491 = vld [vmem:[%s2 + $0x10] sm:$0xff]
      %v492 = vld [vmem:[%s2 + $0x18] sm:$0xff]
      %v493 = vld [vmem:[%s2 + $0x20] sm:$0xff]
      %v494 = vld [vmem:[%s2 + $0x28] sm:$0xff]
      %v495 = vld [vmem:[%s2 + $0x30] sm:$0xff]
      %v496 = vld [vmem:[%s2 + $0x38] sm:$0xff]
      %v497 = vpack.c.bf16 %v482, %v481
      %v498 = vpack.c.bf16 %v484, %v483
      %v499 = vpack.c.bf16 %v486, %v485
      %v500 = vpack.c.bf16 %v488, %v487
      %v501 = vpack.c.bf16 %v490, %v489
      %v502 = vpack.c.bf16 %v492, %v491
      %v503 = vpack.c.bf16 %v494, %v493
      %v504 = vpack.c.bf16 %v496, %v495
      %v505 = vlaneseq
      %v506 = vshrl.u32 %v505, 7
      %v507 = vsub.s32 3, %v506
      %v508 = vrot.slane %v229, %v507
      %v510 = vsel %vm335, %v497, 0
      %v513 = vsel %vm335, %v498, 0
      %v516 = vsel %vm335, %v499, 0
      %v519 = vsel %vm335, %v500, 0
      %521 = vmatprep.subr.bf16.mxu0 0
      %522 = vmatpush1.bf16.msra.mxu0 0
      %523 = vmatprep.subr.bf16.mxu0 0
      %524 = vmatpush1.bf16.msra.mxu0 0
      %525 = vmatprep.subr.bf16.mxu0 0
      %526 = vmatpush1.bf16.msra.mxu0 0
      %527 = vmatprep.subr.bf16.mxu0 0
      %528 = vmatpush1.bf16.msra.mxu0 0
      %529 = vmatprep.subr.bf16.mxu0 0
      %530 = vmatpush1.bf16.msra.mxu0 %v504
      %531 = vmatprep.subr.bf16.mxu0 0
      %532 = vmatpush1.bf16.msra.mxu0 %v503
      %533 = vmatprep.subr.bf16.mxu0 0
      %534 = vmatpush1.bf16.msra.mxu0 %v502
      %535 = vmatprep.subr.bf16.mxu0 0
      %536 = vmatpush1.bf16.msra.mxu0 %v501
      %537 = vmatprep.subr.bf16.mxu0 0
      %538 = vmatpush2.bf16.msra.mxu0 0
      %539 = vmatprep.subr.bf16.mxu0 0
      %540 = vmatpush2.bf16.msra.mxu0 0
      %541 = vmatprep.subr.bf16.mxu0 0
      %542 = vmatpush2.bf16.msra.mxu0 0
      %543 = vmatprep.subr.bf16.mxu0 0
      %544 = vmatpush2.bf16.msra.mxu0 0
      %545 = vmatprep.subr.bf16.mxu0 0
      %546 = vmatpush2.bf16.msra.mxu0 0
      %547 = vmatprep.subr.bf16.mxu0 0
      %548 = vmatpush2.bf16.msra.mxu0 0
      %549 = vmatprep.subr.bf16.mxu0 0
      %550 = vmatpush2.bf16.msra.mxu0 0
      %551 = vmatprep.subr.bf16.mxu0 0
      %552 = vmatpush2.bf16.msra.mxu0 0
      %553 = vmatprep.mubr.bf16.mxu0 0
      %554 = vmatmul.mubr.bf16.gmra.mxu0 %v510
      %v555 = vpop.f32.mrf.mxu0
      %v556 = vadd.f32 %v508, %v555
      %v557 = vpop.f32.mrf.mxu0
      %v558 = vpop.f32.mrf.mxu0
      %v559 = vadd.f32 %v508, %v558
      %v560 = vpop.f32.mrf.mxu0
      %561 = vmatprep.mubr.bf16.mxu0 0
      %562 = vmatmul.mubr.bf16.gmra.mxu0 %v513
      %v563 = vpop.f32.mrf.mxu0
      %v564 = vadd.f32 %v508, %v563
      %v565 = vpop.f32.mrf.mxu0
      %v566 = vpop.f32.mrf.mxu0
      %v567 = vadd.f32 %v508, %v566
      %v568 = vpop.f32.mrf.mxu0
      %569 = vmatprep.mubr.bf16.mxu0 0
      %570 = vmatmul.mubr.bf16.gmra.mxu0 %v516
      %v571 = vpop.f32.mrf.mxu0
      %v572 = vadd.f32 %v508, %v571
      %v573 = vpop.f32.mrf.mxu0
      %v574 = vpop.f32.mrf.mxu0
      %v575 = vadd.f32 %v508, %v574
      %v576 = vpop.f32.mrf.mxu0
      %577 = vmatprep.mubr.bf16.mxu0 0
      %578 = vmatmul.mubr.bf16.gmra.mxu0 %v519
      %v579 = vpop.f32.mrf.mxu0
      %v580 = vadd.f32 %v508, %v579
      %v581 = vpop.f32.mrf.mxu0
      %v582 = vpop.f32.mrf.mxu0
      %v583 = vadd.f32 %v508, %v582
      %v584 = vpop.f32.mrf.mxu0
      %585 = vdwg.mxu0
      %vm586 = vcmask 261120
      %v587 = vsel %vm586, %v556, 0.0
      %588 = vadd.xlane.f32.xlu0 %v587
      %v589 = vpop.xlane.xlu0 %588
      %v590 = vsel %vm586, %v559, 0.0
      %591 = vadd.xlane.f32.xlu0 %v590
      %v592 = vpop.xlane.xlu0 %591
      %v593 = vsel %vm586, %v564, 0.0
      %594 = vadd.xlane.f32.xlu0 %v593
      %v595 = vpop.xlane.xlu0 %594
      %v596 = vsel %vm586, %v567, 0.0
      %597 = vadd.xlane.f32.xlu0 %v596
      %v598 = vpop.xlane.xlu0 %597
      %v599 = vsel %vm586, %v572, 0.0
      %600 = vadd.xlane.f32.xlu0 %v599
      %v601 = vpop.xlane.xlu0 %600
      %v602 = vsel %vm586, %v575, 0.0
      %603 = vadd.xlane.f32.xlu0 %v602
      %v604 = vpop.xlane.xlu0 %603
      %v605 = vsel %vm586, %v580, 0.0
      %606 = vadd.xlane.f32.xlu0 %v605
      %v607 = vpop.xlane.xlu0 %606
      %v608 = vsel %vm586, %v583, 0.0
      %609 = vadd.xlane.f32.xlu0 %v608
      %v610 = vpop.xlane.xlu0 %609
      %v611 = vrcp.pop 32.0
      %v612 = vmul.f32 %v589, %v611
      %v613 = vmul.f32 %v592, %v611
      %v614 = vmul.f32 %v595, %v611
      %v615 = vmul.f32 %v598, %v611
      %v616 = vmul.f32 %v601, %v611
      %v617 = vmul.f32 %v604, %v611
      %v618 = vmul.f32 %v607, %v611
      %v619 = vmul.f32 %v610, %v611
      %v620 = vsub.f32 %v556, %v612
      %v621 = vsub.f32 %v559, %v613
      %v622 = vsub.f32 %v564, %v614
      %v623 = vsub.f32 %v567, %v615
      %v624 = vsub.f32 %v572, %v616
      %v625 = vsub.f32 %v575, %v617
      %v626 = vsub.f32 %v580, %v618
      %v627 = vsub.f32 %v583, %v619
      %v628 = vmul.f32 %v620, %v620
      %v629 = vmul.f32 %v621, %v621
      %v630 = vmul.f32 %v622, %v622
      %v631 = vmul.f32 %v623, %v623
      %v632 = vmul.f32 %v624, %v624
      %v633 = vmul.f32 %v625, %v625
      %v634 = vmul.f32 %v626, %v626
      %v635 = vmul.f32 %v627, %v627
      %v636 = vsel %vm586, %v628, 0.0
      %637 = vadd.xlane.f32.xlu0 %v636
      %v638 = vpop.xlane.xlu0 %637
      %v639 = vsel %vm586, %v629, 0.0
      %640 = vadd.xlane.f32.xlu0 %v639
      %v641 = vpop.xlane.xlu0 %640
      %v642 = vsel %vm586, %v630, 0.0
      %643 = vadd.xlane.f32.xlu0 %v642
      %v644 = vpop.xlane.xlu0 %643
      %v645 = vsel %vm586, %v631, 0.0
      %646 = vadd.xlane.f32.xlu0 %v645
      %v647 = vpop.xlane.xlu0 %646
      %v648 = vsel %vm586, %v632, 0.0
      %649 = vadd.xlane.f32.xlu0 %v648
      %v650 = vpop.xlane.xlu0 %649
      %v651 = vsel %vm586, %v633, 0.0
      %652 = vadd.xlane.f32.xlu0 %v651
      %v653 = vpop.xlane.xlu0 %652
      %v654 = vsel %vm586, %v634, 0.0
      %655 = vadd.xlane.f32.xlu0 %v654
      %v656 = vpop.xlane.xlu0 %655
      %v657 = vsel %vm586, %v635, 0.0
      %658 = vadd.xlane.f32.xlu0 %v657
      %v659 = vpop.xlane.xlu0 %658
      %v660 = vmul.f32 %v638, %v611
      %v661 = vmul.f32 %v641, %v611
      %v662 = vmul.f32 %v644, %v611
      %v663 = vmul.f32 %v647, %v611
      %v664 = vmul.f32 %v650, %v611
      %v665 = vmul.f32 %v653, %v611
      %v666 = vmul.f32 %v656, %v611
      %v667 = vmul.f32 %v659, %v611
      %v668 = vadd.f32 %v660, 1e-05
      %v669 = vadd.f32 %v661, 1e-05
      %v670 = vadd.f32 %v662, 1e-05
      %v671 = vadd.f32 %v663, 1e-05
      %v672 = vadd.f32 %v664, 1e-05
      %v673 = vadd.f32 %v665, 1e-05
      %v674 = vadd.f32 %v666, 1e-05
      %v675 = vadd.f32 %v667, 1e-05
      %v676 = vrsqrt.pop %v668
      %v677 = vrsqrt.pop %v669
      %v678 = vrsqrt.pop %v670
      %v679 = vrsqrt.pop %v671
      %v680 = vrsqrt.pop %v672
      %v681 = vrsqrt.pop %v673
      %v682 = vrsqrt.pop %v674
      %v683 = vrsqrt.pop %v675
      %v684 = vmul.f32 %v620, %v676
      %v685 = vmul.f32 %v621, %v677
      %v686 = vmul.f32 %v622, %v678
      %v687 = vmul.f32 %v623, %v679
      %v688 = vmul.f32 %v624, %v680
      %v689 = vmul.f32 %v625, %v681
      %v690 = vmul.f32 %v626, %v682
      %v691 = vmul.f32 %v627, %v683
      %v692 = vlaneseq
      %v693 = vshrl.u32 %v692, 7
      %v694 = vsub.s32 4, %v693
      %v695 = vrot.slane %v229, %v694
      %v696 = vmul.f32 %v684, %v695
      %v697 = vmul.f32 %v685, %v695
      %v698 = vmul.f32 %v686, %v695
      %v699 = vmul.f32 %v687, %v695
      %v700 = vmul.f32 %v688, %v695
      %v701 = vmul.f32 %v689, %v695
      %v702 = vmul.f32 %v690, %v695
      %v703 = vmul.f32 %v691, %v695
      %v704 = vlaneseq
      %v705 = vshrl.u32 %v704, 7
      %v706 = vsub.s32 5, %v705
      %v707 = vrot.slane %v229, %v706
      %v708 = vadd.f32 %v696, %v707
      %v709 = vadd.f32 %v697, %v707
      %v710 = vadd.f32 %v698, %v707
      %v711 = vadd.f32 %v699, %v707
      %v712 = vadd.f32 %v700, %v707
      %v713 = vadd.f32 %v701, %v707
      %v714 = vadd.f32 %v702, %v707
      %v715 = vadd.f32 %v703, %v707
      %vm716 = vcmp.ge.f32.partialorder %v708, 0.0
      %vm717 = vcmp.ge.f32.partialorder %v709, 0.0
      %vm718 = vcmp.ge.f32.partialorder %v710, 0.0
      %vm719 = vcmp.ge.f32.partialorder %v711, 0.0
      %vm720 = vcmp.ge.f32.partialorder %v712, 0.0
      %vm721 = vcmp.ge.f32.partialorder %v713, 0.0
      %vm722 = vcmp.ge.f32.partialorder %v714, 0.0
      %vm723 = vcmp.ge.f32.partialorder %v715, 0.0
      %v724 = vmul.f32 %v708, 0.01
      %v725 = vmul.f32 %v709, 0.01
      %v726 = vmul.f32 %v710, 0.01
      %v727 = vmul.f32 %v711, 0.01
      %v728 = vmul.f32 %v712, 0.01
      %v729 = vmul.f32 %v713, 0.01
      %v730 = vmul.f32 %v714, 0.01
      %v731 = vmul.f32 %v715, 0.01
      %v732 = vsel %vm716, %v708, %v724
      %v733 = vsel %vm717, %v709, %v725
      %v734 = vsel %vm718, %v710, %v726
      %v735 = vsel %vm719, %v711, %v727
      %v736 = vsel %vm720, %v712, %v728
      %v737 = vsel %vm721, %v713, %v729
      %v738 = vsel %vm722, %v714, %v730
      %v739 = vsel %vm723, %v715, %v731
      %v740 = vld [vmem:[%s3] sm:$0xff]
      %v741 = vld [vmem:[%s3 + $0x8] sm:$0xff]
      %v742 = vld [vmem:[%s3 + $0x10] sm:$0xff]
      %v743 = vld [vmem:[%s3 + $0x18] sm:$0xff]
      %v744 = vpack.c.bf16 %v733, %v732
      %v745 = vpack.c.bf16 %v735, %v734
      %v746 = vpack.c.bf16 %v737, %v736
      %v747 = vpack.c.bf16 %v739, %v738
      %v748 = vpack.c.bf16 %v741, %v740
      %v749 = vpack.c.bf16 %v743, %v742
      %v750 = vlaneseq
      %v751 = vshrl.u32 %v750, 7
      %v752 = vsub.s32 6, %v751
      %v753 = vrot.slane %v229, %v752
      %v755 = vsel %vm586, %v744, 0
      %v758 = vsel %vm586, %v745, 0
      %v761 = vsel %vm586, %v746, 0
      %v764 = vsel %vm586, %v747, 0
      %766 = vmatprep.subr.bf16.mxu0 0
      %767 = vmatpush1.bf16.msra.mxu0 0
      %768 = vmatprep.subr.bf16.mxu0 0
      %769 = vmatpush1.bf16.msra.mxu0 0
      %770 = vmatprep.subr.bf16.mxu0 0
      %771 = vmatpush1.bf16.msra.mxu0 0
      %772 = vmatprep.subr.bf16.mxu0 0
      %773 = vmatpush1.bf16.msra.mxu0 0
      %774 = vmatprep.subr.bf16.mxu0 0
      %775 = vmatpush1.bf16.msra.mxu0 0
      %776 = vmatprep.subr.bf16.mxu0 0
      %777 = vmatpush1.bf16.msra.mxu0 0
      %778 = vmatprep.subr.bf16.mxu0 0
      %779 = vmatpush1.bf16.msra.mxu0 %v749
      %780 = vmatprep.subr.bf16.mxu0 0
      %781 = vmatpush1.bf16.msra.mxu0 %v748
      %782 = vmatprep.subr.bf16.mxu0 0
      %783 = vmatpush2.bf16.msra.mxu0 0
      %784 = vmatprep.subr.bf16.mxu0 0
      %785 = vmatpush2.bf16.msra.mxu0 0
      %786 = vmatprep.subr.bf16.mxu0 0
      %787 = vmatpush2.bf16.msra.mxu0 0
      %788 = vmatprep.subr.bf16.mxu0 0
      %789 = vmatpush2.bf16.msra.mxu0 0
      %790 = vmatprep.subr.bf16.mxu0 0
      %791 = vmatpush2.bf16.msra.mxu0 0
      %792 = vmatprep.subr.bf16.mxu0 0
      %793 = vmatpush2.bf16.msra.mxu0 0
      %794 = vmatprep.subr.bf16.mxu0 0
      %795 = vmatpush2.bf16.msra.mxu0 0
      %796 = vmatprep.subr.bf16.mxu0 0
      %797 = vmatpush2.bf16.msra.mxu0 0
      %798 = vmatprep.mubr.bf16.mxu0 0
      %799 = vmatmul.mubr.bf16.gmra.mxu0 %v755
      %v800 = vpop.f32.mrf.mxu0
      %v801 = vadd.f32 %v753, %v800
      %v802 = vpop.f32.mrf.mxu0
      %v803 = vpop.f32.mrf.mxu0
      %v804 = vadd.f32 %v753, %v803
      %v805 = vpop.f32.mrf.mxu0
      %806 = vmatprep.mubr.bf16.mxu0 0
      %807 = vmatmul.mubr.bf16.gmra.mxu0 %v758
      %v808 = vpop.f32.mrf.mxu0
      %v809 = vadd.f32 %v753, %v808
      %v810 = vpop.f32.mrf.mxu0
      %v811 = vpop.f32.mrf.mxu0
      %v812 = vadd.f32 %v753, %v811
      %v813 = vpop.f32.mrf.mxu0
      %814 = vmatprep.mubr.bf16.mxu0 0
      %815 = vmatmul.mubr.bf16.gmra.mxu0 %v761
      %v816 = vpop.f32.mrf.mxu0
      %v817 = vadd.f32 %v753, %v816
      %v818 = vpop.f32.mrf.mxu0
      %v819 = vpop.f32.mrf.mxu0
      %v820 = vadd.f32 %v753, %v819
      %v821 = vpop.f32.mrf.mxu0
      %822 = vmatprep.mubr.bf16.mxu0 0
      %823 = vmatmul.mubr.bf16.gmra.mxu0 %v764
      %v824 = vpop.f32.mrf.mxu0
      %v825 = vadd.f32 %v753, %v824
      %v826 = vpop.f32.mrf.mxu0
      %v827 = vpop.f32.mrf.mxu0
      %v828 = vadd.f32 %v753, %v827
      %v829 = vpop.f32.mrf.mxu0
      %830 = vdwg.mxu0
      %831 = vst.msk [vmem:[%s226] sm:$0xff] %vm586, %v801
      %832 = vst.msk [vmem:[%s226 + $0x8] sm:$0xff] %vm586, %v804
      %833 = vst.msk [vmem:[%s226 + $0x10] sm:$0xff] %vm586, %v809
      %834 = vst.msk [vmem:[%s226 + $0x18] sm:$0xff] %vm586, %v812
      %835 = vst.msk [vmem:[%s226 + $0x20] sm:$0xff] %vm586, %v817
      %836 = vst.msk [vmem:[%s226 + $0x28] sm:$0xff] %vm586, %v820
      %837 = vst.msk [vmem:[%s226 + $0x30] sm:$0xff] %vm586, %v825
      %838 = vst.msk [vmem:[%s226 + $0x38] sm:$0xff] %vm586, %v828
      %s839 = smul.u32 8, %s16
      %p840 = scmp.lt.s32.totalorder %s839, 15
      %s841 = scalar_select %p840, %s839, 15
      %s842 = smul.addr %s841, 8
      %s843 = scalar_lea.vmem %s5, %s842
      // Predicated region
      $region41: #{variational_encoder_forward.5} parent=39 // pred_check
        %p844 = pneg %p144
      $region42: #{variational_encoder_forward.5} parent=39 // pred_check_branch
        %846 = sbr.rel (%p844) target = $region44
      $region43: #{variational_encoder_forward.5} parent=39 // pred_region
        %s847 = smul.u32 8, %s16
      $region44: #{variational_encoder_forward.5} parent=39 // pred_fallthru
        _
    $region40: #{variational_encoder_forward.5} parent=5 // pred_fallthru
      _
    %p848 = scmp.le.s32.totalorder 2, %s11
    // Predicated region
    $region45: #{variational_encoder_forward.5} parent=5 // pred_check
      %p849 = pneg %p848
    $region46: #{variational_encoder_forward.5} parent=5 // pred_check_branch
      %851 = sbr.rel (%p849) target = $region48
    $region47: #{variational_encoder_forward.5} parent=5 // pred_region
      %s852 = ssub.s32 %s11, 2
      // Predicated region
      $region49: #{variational_encoder_forward.5} parent=47 // pred_check
        %p853 = pneg %p150
      $region50: #{variational_encoder_forward.5} parent=47 // pred_check_branch
        %855 = sbr.rel (%p853) target = $region52
      $region51: #{variational_encoder_forward.5} parent=47 // pred_region
        %s856 = smul.u32 8, %s17
        %p857 = scmp.lt.s32.totalorder %s856, 15
        %s858 = scalar_select %p857, %s856, 15
        %s859 = smul.addr %s858, 8
        %s860 = scalar_lea.vmem %s5, %s859
      $region52: #{variational_encoder_forward.5} parent=47 // pred_fallthru
        _
    $region48: #{variational_encoder_forward.5} parent=5 // pred_fallthru
      _
  $region6: #{variational_encoder_forward.5} parent=0 // loop_footer
    %s15 = sadd.s32 1, %s11
  $region7: #{variational_encoder_forward.5} parent=0 // loop_footer_branch
    %10 = sbr.rel target = $region3
  $region8: #{variational_encoder_forward.5} parent=0 // loop_exit
    _

</llo_original>
